<compile_context>
chip_gen: v7x
topology: tpu7x:2x2x1
jax: 0.10.0
libtpu: 0.0.40
codegen_flags: <defaults>
</compile_context>

<pallas_src>
import functools

import numpy as np
import jax
import jax.numpy as jnp
from jax.experimental import pallas as pl
from jax.experimental.pallas import tpu as pltpu


# ----------------------------- Pallas kernel -------------------------------


def _basic_block_kernel(x_ref, m_ref, w1_ref, b1_ref, w2_ref, b2_ref, o_ref,
                        lhs_ref, *, shifts, needs_mask):
    """Fused BasicBlock forward for one lane-stacked group of NB images.

    x_ref  : (1, C, L)  f32   lane-stacked input (L = NB*H*W); also the residual
    m_ref  : (9, L)     f32   0/1 'same'-padding border mask per conv tap (tiled per image)
    w1_ref : (C, 9*C)   bf16  BN-folded conv1 weights (im2row layout)
    b1_ref : (C, 1)     f32   BN-folded conv1 bias
    w2_ref : (C, 9*C)   bf16  BN-folded conv2 weights
    b2_ref : (C, 1)     f32   BN-folded conv2 bias
    o_ref  : (1, C, L)  f32   output
    lhs_ref: (9*C, L)   f32   VMEM scratch: im2row LHS assembly buffer
    """
    C = x_ref.shape[1]
    L = x_ref.shape[2]
    x = x_ref[0]                       # (C, L) f32
    masks = m_ref[...]                 # (9, L) f32

    def conv3x3_bn(v, w_ref, b_ref):
        # One 3x3 'same' conv + folded BN as a single K=9*C MXU matmul.
        # Taps come from XLU lane rolls; the masks zero every out-of-image,
        # wrapped, or cross-image lane, so no padded halo buffer is needed.
        for t, s in enumerate(shifts):                 # static 3x3 tap offsets
            tap = v if s == 0 else pltpu.roll(v, shift=(-s) % L, axis=1)
            if needs_mask[t]:                          # skip all-ones (center) mask
                tap = tap * masks[t:t + 1, :]
            lhs_ref[t * C:(t + 1) * C, :] = tap        # assemble im2row LHS in VMEM
        # f32 elementwise everywhere; single bf16 cast right before the MXU.
        lhs = lhs_ref[...].astype(jnp.bfloat16)        # (9C, L)
        acc = jnp.dot(w_ref[...], lhs, preferred_element_type=jnp.float32)
        return acc + b_ref[...]                        # (C, L) f32

    h1 = jnp.maximum(conv3x3_bn(x, w1_ref, b1_ref), 0.0)      # conv1 + BN1 + ReLU
    out = conv3x3_bn(h1, w2_ref, b2_ref) + x                  # conv2 + BN2 + residual
    # NOTE: SHRNet's BasicBlock has no ReLU after the residual add (matches spec).
    o_ref[0] = out.astype(o_ref.dtype)


# ------------------------------ JAX wrappers --------------------------------


def _fold_bn_to_matrix(w_oihw, gamma, beta, mean, var, eps):
    """Fold inference-mode BatchNorm into an im2row weight matrix + bias."""
    scale = gamma / jnp.sqrt(var + eps)                          # (O,)
    O, I, KH, KW = w_oihw.shape
    w = jnp.transpose(w_oihw, (0, 2, 3, 1)).reshape(O, KH * KW * I)   # (O, 9*I)
    w_mat = (w * scale[:, None]).astype(jnp.bfloat16)
    bias = (beta - mean * scale).reshape(O, 1).astype(jnp.float32)
    return w_mat, bias


def _taps(H, W, dil, p):
    """Static flat shifts + 0/1 border masks for a 'same' 3x3 (dilated) conv."""
    hh, ww = np.meshgrid(np.arange(H), np.arange(W), indexing="ij")
    hh, ww = hh.reshape(-1), ww.reshape(-1)
    shifts, masks = [], []
    for kh in range(3):
        for kw in range(3):
            dh, dw = kh * dil - p, kw * dil - p
            shifts.append(dh * W + dw)
            valid = ((hh + dh >= 0) & (hh + dh < H) &
                     (ww + dw >= 0) & (ww + dw < W))
            masks.append(valid.astype(np.float32))
    return tuple(shifts), np.stack(masks, axis=0)                # (9, H*W)


def basic_block_forward(x_nchw, params, *, stride, pad, dilation, eps=1e-5,
                        images_per_step=None):
    """BasicBlock.forward for the downsample=None path (stride=1, inplanes==planes)."""
    N, Cin, H, W = x_nchw.shape
    p = dilation if dilation > 1 else pad
    Cmid, Cout = params["w1"].shape[0], params["w2"].shape[0]
    # TODO(synk): `downsample` is an arbitrary caller-supplied nn.Module; only the
    # downsample=None path (stride=1, 'same' conv, inplanes==planes) is implemented.
    assert stride == 1 and p == dilation and Cin == Cmid == Cout, (
        "only the downsample=None residual path (stride=1, inplanes==planes) is supported")

    # Lane-stack NB images per grid step but keep >=2 grid steps when possible
    # (the "parallel" axis is megacore-sharded across v7x's two TensorCores).
    if images_per_step is None:
        images_per_step = 2 if (N % 2 == 0 and N >= 4) else 1
    NB = images_per_step
    assert N % NB == 0, "batch must be divisible by images_per_step"
    G = N // NB
    HW = H * W
    L = NB * HW

    w1m, b1 = _fold_bn_to_matrix(params["w1"], params["bn1_gamma"], params["bn1_beta"],
                                 params["bn1_mean"], params["bn1_var"], eps)
    w2m, b2 = _fold_bn_to_matrix(params["w2"], params["bn2_gamma"], params["bn2_beta"],
                                 params["bn2_mean"], params["bn2_var"], eps)

    shifts, masks = _taps(H, W, dilation, p)
    needs_mask = tuple(bool(not np.all(m)) for m in masks)       # center tap is all-ones
    masks_l = jnp.asarray(np.tile(masks, (1, NB)), dtype=jnp.float32)   # (9, L)

    # Host-side lane-stacking relayout (layout plumbing only): (N,C,H,W) -> (G, C, NB*HW)
    # keeps the kernel's minor dim lane-dense (L >= 128) and HBM DMAs contiguous.
    x_stack = jnp.transpose(x_nchw.reshape(G, NB, Cin, HW), (0, 2, 1, 3)).reshape(G, Cin, L)

    kernel = functools.partial(_basic_block_kernel, shifts=shifts, needs_mask=needs_mask)
    # TODO(synk): for large H*W add a spatial row-tile (+halo) grid axis, set
    # vmem_limit_bytes explicitly against v7x's 64 MiB VMEM, and single-buffer the
    # constant inputs (weights/masks) via pipeline_mode=pl.Buffered(1); at these
    # sizes (~0.6 MB of VMEM per step) the defaults are fine.
    out_stack = pl.pallas_call(
        kernel,
        out_shape=jax.ShapeDtypeStruct((G, Cout, L), jnp.float32),
        grid=(G,),
        in_specs=[
            pl.BlockSpec((1, Cin, L), lambda g: (g, 0, 0)),
            pl.BlockSpec((9, L), lambda g: (0, 0)),
            pl.BlockSpec((Cmid, 9 * Cin), lambda g: (0, 0)),
            pl.BlockSpec((Cmid, 1), lambda g: (0, 0)),
            pl.BlockSpec((Cout, 9 * Cmid), lambda g: (0, 0)),
            pl.BlockSpec((Cout, 1), lambda g: (0, 0)),
        ],
        out_specs=pl.BlockSpec((1, Cout, L), lambda g: (g, 0, 0)),
        scratch_shapes=[pltpu.VMEM((9 * Cin, L), jnp.float32)],
        compiler_params=pltpu.CompilerParams(dimension_semantics=("parallel",)),
    )(x_stack, masks_l, w1m, b1, w2m, b2)

    out = jnp.transpose(out_stack.reshape(G, Cout, NB, HW), (0, 2, 1, 3))
    return out.reshape(N, Cout, H, W)


# ------------------------------ reference -----------------------------------


def _ref_convbn(x, w_oihw, gamma, beta, mean, var, p, dil, eps=1e-5):
    scale = gamma / jnp.sqrt(var + eps)
    w = w_oihw * scale[:, None, None, None]
    b = beta - mean * scale
    y = jax.lax.conv_general_dilated(
        x.astype(jnp.bfloat16), w.astype(jnp.bfloat16),
        window_strides=(1, 1), padding=((p, p), (p, p)),
        rhs_dilation=(dil, dil),
        dimension_numbers=("NCHW", "OIHW", "NCHW"),
        preferred_element_type=jnp.float32)
    return y + b[None, :, None, None]


def ref_forward(x_nchw, params, *, stride, pad, dilation, eps=1e-5):
    assert stride == 1
    p = dilation if dilation > 1 else pad
    out = jnp.maximum(
        _ref_convbn(x_nchw, params["w1"], params["bn1_gamma"], params["bn1_beta"],
                    params["bn1_mean"], params["bn1_var"], p, dilation, eps), 0.0)
    out = _ref_convbn(out, params["w2"], params["bn2_gamma"], params["bn2_beta"],
                      params["bn2_mean"], params["bn2_var"], p, dilation, eps)
    return out + x_nchw


# -------------------------------- main ---------------------------------------


if __name__ == "__main__":
    N, inplanes, planes, H, W = 4, 8, 8, 16, 16
    stride, pad, dilation = 1, 1, 1     # downsample=None => stride 1, inplanes==planes

    key = jax.random.PRNGKey(0)
    ks = jax.random.split(key, 11)
    params = {
        "w1": 0.1 * jax.random.normal(ks[0], (planes, inplanes, 3, 3), jnp.float32),
        "bn1_gamma": 1.0 + 0.1 * jax.random.normal(ks[1], (planes,), jnp.float32),
        "bn1_beta": 0.1 * jax.random.normal(ks[2], (planes,), jnp.float32),
        "bn1_mean": 0.1 * jax.random.normal(ks[3], (planes,), jnp.float32),
        "bn1_var": jax.random.uniform(ks[4], (planes,), jnp.float32, 0.5, 1.5),
        "w2": 0.1 * jax.random.normal(ks[5], (planes, planes, 3, 3), jnp.float32),
        "bn2_gamma": 1.0 + 0.1 * jax.random.normal(ks[6], (planes,), jnp.float32),
        "bn2_beta": 0.1 * jax.random.normal(ks[7], (planes,), jnp.float32),
        "bn2_mean": 0.1 * jax.random.normal(ks[8], (planes,), jnp.float32),
        "bn2_var": jax.random.uniform(ks[9], (planes,), jnp.float32, 0.5, 1.5),
    }
    x = jax.random.normal(ks[10], (N, inplanes, H, W), jnp.float32)

    out = basic_block_forward(x, params, stride=stride, pad=pad, dilation=dilation)
    out = jax.block_until_ready(out)

    ref = ref_forward(x, params, stride=stride, pad=pad, dilation=dilation)
    assert out.shape == (N, planes, H, W), out.shape
    err = float(jnp.max(jnp.abs(out - ref)))
    assert jnp.allclose(out, ref, rtol=2e-3, atol=2e-3), err

    print("KERNEL_OK")
</pallas_src>

<mosaic_0001>
module attributes {stable_mosaic.version = 11 : i64} {
  func.func @_basic_block_kernel(%arg0: i32, %arg1: memref<1x8x512xf32, #tpu.memory_space<vmem>>, %arg2: memref<9x512xf32, #tpu.memory_space<vmem>>, %arg3: memref<8x72xbf16, #tpu.memory_space<vmem>>, %arg4: memref<8x1xf32, #tpu.memory_space<vmem>>, %arg5: memref<8x72xbf16, #tpu.memory_space<vmem>>, %arg6: memref<8x1xf32, #tpu.memory_space<vmem>>, %arg7: memref<1x8x512xf32, #tpu.memory_space<vmem>>, %arg8: memref<72x512xf32, #tpu.memory_space<vmem>>) attributes {dimension_semantics = [#tpu.dimension_semantics<parallel>], iteration_bounds = array<i64: 2>, scalar_prefetch = 0 : i64, scratch_operands = 1 : i64, tpu.core_type = #tpu.core_type<tc>, window_params = [{transform_indices = @transform_0, window_bounds = array<i64: 1, 8, 512>}, {pipeline_mode = #tpu.pipeline_mode<synchronous>, transform_indices = @transform_1, window_bounds = array<i64: 9, 512>}, {pipeline_mode = #tpu.pipeline_mode<synchronous>, transform_indices = @transform_2, window_bounds = array<i64: 8, 72>}, {pipeline_mode = #tpu.pipeline_mode<synchronous>, transform_indices = @transform_3, window_bounds = array<i64: 8, 1>}, {pipeline_mode = #tpu.pipeline_mode<synchronous>, transform_indices = @transform_4, window_bounds = array<i64: 8, 72>}, {pipeline_mode = #tpu.pipeline_mode<synchronous>, transform_indices = @transform_5, window_bounds = array<i64: 8, 1>}, {transform_indices = @transform_6, window_bounds = array<i64: 1, 8, 512>}]} {
    %c0 = arith.constant 0 : index
    %c0_0 = arith.constant 0 : index
    %c0_1 = arith.constant 0 : index
    %0 = vector.load %arg1[%c0, %c0_0, %c0_1] : memref<1x8x512xf32, #tpu.memory_space<vmem>>, vector<1x8x512xf32>
    %1 = vector.shape_cast %0 : vector<1x8x512xf32> to vector<8x512xf32>
    %c0_2 = arith.constant 0 : index
    %c0_3 = arith.constant 0 : index
    %2 = vector.load %arg2[%c0_2, %c0_3] : memref<9x512xf32, #tpu.memory_space<vmem>>, vector<9x512xf32>
    %c17_i32 = arith.constant 17 : i32
    %3 = tpu.dynamic_rotate %1 by %c17_i32 dim 1 : vector<8x512xf32>, i32 -> vector<8x512xf32>
    %4 = vector.extract_strided_slice %2 {offsets = [0, 0], sizes = [1, 512], strides = [1, 1]} : vector<9x512xf32> to vector<1x512xf32>
    %5 = vector.broadcast %4 : vector<1x512xf32> to vector<8x512xf32>
    %6 = arith.mulf %3, %5 : vector<8x512xf32>
    %c0_4 = arith.constant 0 : index
    %c0_5 = arith.constant 0 : index
    %7 = vector.load %arg8[%c0_4, %c0_5] : memref<72x512xf32, #tpu.memory_space<vmem>>, vector<8x512xf32>
    tpu.vector_store %arg8[%c0_4, %c0_5], %6 {strides = array<i32>} : memref<72x512xf32, #tpu.memory_space<vmem>>, vector<8x512xf32>,
    %c16_i32 = arith.constant 16 : i32
    %8 = tpu.dynamic_rotate %1 by %c16_i32 dim 1 : vector<8x512xf32>, i32 -> vector<8x512xf32>
    %9 = vector.extract_strided_slice %2 {offsets = [1, 0], sizes = [1, 512], strides = [1, 1]} : vector<9x512xf32> to vector<1x512xf32>
    %10 = vector.broadcast %9 : vector<1x512xf32> to vector<8x512xf32>
    %11 = arith.mulf %8, %10 : vector<8x512xf32>
    %c8 = arith.constant 8 : index
    %c0_6 = arith.constant 0 : index
    %12 = vector.load %arg8[%c8, %c0_6] : memref<72x512xf32, #tpu.memory_space<vmem>>, vector<8x512xf32>
    tpu.vector_store %arg8[%c8, %c0_6], %11 {strides = array<i32>} : memref<72x512xf32, #tpu.memory_space<vmem>>, vector<8x512xf32>,
    %c15_i32 = arith.constant 15 : i32
    %13 = tpu.dynamic_rotate %1 by %c15_i32 dim 1 : vector<8x512xf32>, i32 -> vector<8x512xf32>
    %14 = vector.extract_strided_slice %2 {offsets = [2, 0], sizes = [1, 512], strides = [1, 1]} : vector<9x512xf32> to vector<1x512xf32>
    %15 = vector.broadcast %14 : vector<1x512xf32> to vector<8x512xf32>
    %16 = arith.mulf %13, %15 : vector<8x512xf32>
    %c16 = arith.constant 16 : index
    %c0_7 = arith.constant 0 : index
    %17 = vector.load %arg8[%c16, %c0_7] : memref<72x512xf32, #tpu.memory_space<vmem>>, vector<8x512xf32>
    tpu.vector_store %arg8[%c16, %c0_7], %16 {strides = array<i32>} : memref<72x512xf32, #tpu.memory_space<vmem>>, vector<8x512xf32>,
    %c1_i32 = arith.constant 1 : i32
    %18 = tpu.dynamic_rotate %1 by %c1_i32 dim 1 : vector<8x512xf32>, i32 -> vector<8x512xf32>
    %19 = vector.extract_strided_slice %2 {offsets = [3, 0], sizes = [1, 512], strides = [1, 1]} : vector<9x512xf32> to vector<1x512xf32>
    %20 = vector.broadcast %19 : vector<1x512xf32> to vector<8x512xf32>
    %21 = arith.mulf %18, %20 : vector<8x512xf32>
    %c24 = arith.constant 24 : index
    %c0_8 = arith.constant 0 : index
    %22 = vector.load %arg8[%c24, %c0_8] : memref<72x512xf32, #tpu.memory_space<vmem>>, vector<8x512xf32>
    tpu.vector_store %arg8[%c24, %c0_8], %21 {strides = array<i32>} : memref<72x512xf32, #tpu.memory_space<vmem>>, vector<8x512xf32>,
    %c32 = arith.constant 32 : index
    %c0_9 = arith.constant 0 : index
    %23 = vector.load %arg8[%c32, %c0_9] : memref<72x512xf32, #tpu.memory_space<vmem>>, vector<8x512xf32>
    tpu.vector_store %arg8[%c32, %c0_9], %1 {strides = array<i32>} : memref<72x512xf32, #tpu.memory_space<vmem>>, vector<8x512xf32>,
    %c511_i32 = arith.constant 511 : i32
    %24 = tpu.dynamic_rotate %1 by %c511_i32 dim 1 : vector<8x512xf32>, i32 -> vector<8x512xf32>
    %25 = vector.extract_strided_slice %2 {offsets = [5, 0], sizes = [1, 512], strides = [1, 1]} : vector<9x512xf32> to vector<1x512xf32>
    %26 = vector.broadcast %25 : vector<1x512xf32> to vector<8x512xf32>
    %27 = arith.mulf %24, %26 : vector<8x512xf32>
    %c40 = arith.constant 40 : index
    %c0_10 = arith.constant 0 : index
    %28 = vector.load %arg8[%c40, %c0_10] : memref<72x512xf32, #tpu.memory_space<vmem>>, vector<8x512xf32>
    tpu.vector_store %arg8[%c40, %c0_10], %27 {strides = array<i32>} : memref<72x512xf32, #tpu.memory_space<vmem>>, vector<8x512xf32>,
    %c497_i32 = arith.constant 497 : i32
    %29 = tpu.dynamic_rotate %1 by %c497_i32 dim 1 : vector<8x512xf32>, i32 -> vector<8x512xf32>
    %30 = vector.extract_strided_slice %2 {offsets = [6, 0], sizes = [1, 512], strides = [1, 1]} : vector<9x512xf32> to vector<1x512xf32>
    %31 = vector.broadcast %30 : vector<1x512xf32> to vector<8x512xf32>
    %32 = arith.mulf %29, %31 : vector<8x512xf32>
    %c48 = arith.constant 48 : index
    %c0_11 = arith.constant 0 : index
    %33 = vector.load %arg8[%c48, %c0_11] : memref<72x512xf32, #tpu.memory_space<vmem>>, vector<8x512xf32>
    tpu.vector_store %arg8[%c48, %c0_11], %32 {strides = array<i32>} : memref<72x512xf32, #tpu.memory_space<vmem>>, vector<8x512xf32>,
    %c496_i32 = arith.constant 496 : i32
    %34 = tpu.dynamic_rotate %1 by %c496_i32 dim 1 : vector<8x512xf32>, i32 -> vector<8x512xf32>
    %35 = vector.extract_strided_slice %2 {offsets = [7, 0], sizes = [1, 512], strides = [1, 1]} : vector<9x512xf32> to vector<1x512xf32>
    %36 = vector.broadcast %35 : vector<1x512xf32> to vector<8x512xf32>
    %37 = arith.mulf %34, %36 : vector<8x512xf32>
    %c56 = arith.constant 56 : index
    %c0_12 = arith.constant 0 : index
    %38 = vector.load %arg8[%c56, %c0_12] : memref<72x512xf32, #tpu.memory_space<vmem>>, vector<8x512xf32>
    tpu.vector_store %arg8[%c56, %c0_12], %37 {strides = array<i32>} : memref<72x512xf32, #tpu.memory_space<vmem>>, vector<8x512xf32>,
    %c495_i32 = arith.constant 495 : i32
    %39 = tpu.dynamic_rotate %1 by %c495_i32 dim 1 : vector<8x512xf32>, i32 -> vector<8x512xf32>
    %40 = vector.extract_strided_slice %2 {offsets = [8, 0], sizes = [1, 512], strides = [1, 1]} : vector<9x512xf32> to vector<1x512xf32>
    %41 = vector.broadcast %40 : vector<1x512xf32> to vector<8x512xf32>
    %42 = arith.mulf %39, %41 : vector<8x512xf32>
    %c64 = arith.constant 64 : index
    %c0_13 = arith.constant 0 : index
    %43 = vector.load %arg8[%c64, %c0_13] : memref<72x512xf32, #tpu.memory_space<vmem>>, vector<8x512xf32>
    tpu.vector_store %arg8[%c64, %c0_13], %42 {strides = array<i32>} : memref<72x512xf32, #tpu.memory_space<vmem>>, vector<8x512xf32>,
    %c0_14 = arith.constant 0 : index
    %c0_15 = arith.constant 0 : index
    %44 = vector.load %arg8[%c0_14, %c0_15] : memref<72x512xf32, #tpu.memory_space<vmem>>, vector<72x512xf32>
    %45 = arith.truncf %44 : vector<72x512xf32> to vector<72x512xbf16>
    %c0_16 = arith.constant 0 : index
    %c0_17 = arith.constant 0 : index
    %46 = vector.load %arg3[%c0_16, %c0_17] : memref<8x72xbf16, #tpu.memory_space<vmem>>, vector<8x72xbf16>
    %cst = arith.constant dense<0.000000e+00> : vector<8x512xf32>
    %47 = tpu.matmul %46, %45, %cst {dimension_numbers = #tpu.dot_dimension_numbers<[1], [0], [0], [1], [0, 0, 1, 1], [], []>} : vector<8x72xbf16>, vector<72x512xbf16>, vector<8x512xf32> -> vector<8x512xf32>
    %c0_18 = arith.constant 0 : index
    %c0_19 = arith.constant 0 : index
    %48 = vector.load %arg4[%c0_18, %c0_19] : memref<8x1xf32, #tpu.memory_space<vmem>>, vector<8x1xf32>
    %49 = vector.broadcast %48 : vector<8x1xf32> to vector<8x512xf32>
    %50 = arith.addf %47, %49 : vector<8x512xf32>
    %cst_20 = arith.constant 0.000000e+00 : f32
    %51 = vector.broadcast %cst_20 : f32 to vector<8x512xf32>
    %52 = arith.maximumf %50, %51 : vector<8x512xf32>
    %c17_i32_21 = arith.constant 17 : i32
    %53 = tpu.dynamic_rotate %52 by %c17_i32_21 dim 1 : vector<8x512xf32>, i32 -> vector<8x512xf32>
    %54 = vector.extract_strided_slice %2 {offsets = [0, 0], sizes = [1, 512], strides = [1, 1]} : vector<9x512xf32> to vector<1x512xf32>
    %55 = vector.broadcast %54 : vector<1x512xf32> to vector<8x512xf32>
    %56 = arith.mulf %53, %55 : vector<8x512xf32>
    %c0_22 = arith.constant 0 : index
    %c0_23 = arith.constant 0 : index
    %57 = vector.load %arg8[%c0_22, %c0_23] : memref<72x512xf32, #tpu.memory_space<vmem>>, vector<8x512xf32>
    tpu.vector_store %arg8[%c0_22, %c0_23], %56 {strides = array<i32>} : memref<72x512xf32, #tpu.memory_space<vmem>>, vector<8x512xf32>,
    %c16_i32_24 = arith.constant 16 : i32
    %58 = tpu.dynamic_rotate %52 by %c16_i32_24 dim 1 : vector<8x512xf32>, i32 -> vector<8x512xf32>
    %59 = vector.extract_strided_slice %2 {offsets = [1, 0], sizes = [1, 512], strides = [1, 1]} : vector<9x512xf32> to vector<1x512xf32>
    %60 = vector.broadcast %59 : vector<1x512xf32> to vector<8x512xf32>
    %61 = arith.mulf %58, %60 : vector<8x512xf32>
    %c8_25 = arith.constant 8 : index
    %c0_26 = arith.constant 0 : index
    %62 = vector.load %arg8[%c8_25, %c0_26] : memref<72x512xf32, #tpu.memory_space<vmem>>, vector<8x512xf32>
    tpu.vector_store %arg8[%c8_25, %c0_26], %61 {strides = array<i32>} : memref<72x512xf32, #tpu.memory_space<vmem>>, vector<8x512xf32>,
    %c15_i32_27 = arith.constant 15 : i32
    %63 = tpu.dynamic_rotate %52 by %c15_i32_27 dim 1 : vector<8x512xf32>, i32 -> vector<8x512xf32>
    %64 = vector.extract_strided_slice %2 {offsets = [2, 0], sizes = [1, 512], strides = [1, 1]} : vector<9x512xf32> to vector<1x512xf32>
    %65 = vector.broadcast %64 : vector<1x512xf32> to vector<8x512xf32>
    %66 = arith.mulf %63, %65 : vector<8x512xf32>
    %c16_28 = arith.constant 16 : index
    %c0_29 = arith.constant 0 : index
    %67 = vector.load %arg8[%c16_28, %c0_29] : memref<72x512xf32, #tpu.memory_space<vmem>>, vector<8x512xf32>
    tpu.vector_store %arg8[%c16_28, %c0_29], %66 {strides = array<i32>} : memref<72x512xf32, #tpu.memory_space<vmem>>, vector<8x512xf32>,
    %c1_i32_30 = arith.constant 1 : i32
    %68 = tpu.dynamic_rotate %52 by %c1_i32_30 dim 1 : vector<8x512xf32>, i32 -> vector<8x512xf32>
    %69 = vector.extract_strided_slice %2 {offsets = [3, 0], sizes = [1, 512], strides = [1, 1]} : vector<9x512xf32> to vector<1x512xf32>
    %70 = vector.broadcast %69 : vector<1x512xf32> to vector<8x512xf32>
    %71 = arith.mulf %68, %70 : vector<8x512xf32>
    %c24_31 = arith.constant 24 : index
    %c0_32 = arith.constant 0 : index
    %72 = vector.load %arg8[%c24_31, %c0_32] : memref<72x512xf32, #tpu.memory_space<vmem>>, vector<8x512xf32>
    tpu.vector_store %arg8[%c24_31, %c0_32], %71 {strides = array<i32>} : memref<72x512xf32, #tpu.memory_space<vmem>>, vector<8x512xf32>,
    %c32_33 = arith.constant 32 : index
    %c0_34 = arith.constant 0 : index
    %73 = vector.load %arg8[%c32_33, %c0_34] : memref<72x512xf32, #tpu.memory_space<vmem>>, vector<8x512xf32>
    tpu.vector_store %arg8[%c32_33, %c0_34], %52 {strides = array<i32>} : memref<72x512xf32, #tpu.memory_space<vmem>>, vector<8x512xf32>,
    %c511_i32_35 = arith.constant 511 : i32
    %74 = tpu.dynamic_rotate %52 by %c511_i32_35 dim 1 : vector<8x512xf32>, i32 -> vector<8x512xf32>
    %75 = vector.extract_strided_slice %2 {offsets = [5, 0], sizes = [1, 512], strides = [1, 1]} : vector<9x512xf32> to vector<1x512xf32>
    %76 = vector.broadcast %75 : vector<1x512xf32> to vector<8x512xf32>
    %77 = arith.mulf %74, %76 : vector<8x512xf32>
    %c40_36 = arith.constant 40 : index
    %c0_37 = arith.constant 0 : index
    %78 = vector.load %arg8[%c40_36, %c0_37] : memref<72x512xf32, #tpu.memory_space<vmem>>, vector<8x512xf32>
    tpu.vector_store %arg8[%c40_36, %c0_37], %77 {strides = array<i32>} : memref<72x512xf32, #tpu.memory_space<vmem>>, vector<8x512xf32>,
    %c497_i32_38 = arith.constant 497 : i32
    %79 = tpu.dynamic_rotate %52 by %c497_i32_38 dim 1 : vector<8x512xf32>, i32 -> vector<8x512xf32>
    %80 = vector.extract_strided_slice %2 {offsets = [6, 0], sizes = [1, 512], strides = [1, 1]} : vector<9x512xf32> to vector<1x512xf32>
    %81 = vector.broadcast %80 : vector<1x512xf32> to vector<8x512xf32>
    %82 = arith.mulf %79, %81 : vector<8x512xf32>
    %c48_39 = arith.constant 48 : index
    %c0_40 = arith.constant 0 : index
    %83 = vector.load %arg8[%c48_39, %c0_40] : memref<72x512xf32, #tpu.memory_space<vmem>>, vector<8x512xf32>
    tpu.vector_store %arg8[%c48_39, %c0_40], %82 {strides = array<i32>} : memref<72x512xf32, #tpu.memory_space<vmem>>, vector<8x512xf32>,
    %c496_i32_41 = arith.constant 496 : i32
    %84 = tpu.dynamic_rotate %52 by %c496_i32_41 dim 1 : vector<8x512xf32>, i32 -> vector<8x512xf32>
    %85 = vector.extract_strided_slice %2 {offsets = [7, 0], sizes = [1, 512], strides = [1, 1]} : vector<9x512xf32> to vector<1x512xf32>
    %86 = vector.broadcast %85 : vector<1x512xf32> to vector<8x512xf32>
    %87 = arith.mulf %84, %86 : vector<8x512xf32>
    %c56_42 = arith.constant 56 : index
    %c0_43 = arith.constant 0 : index
    %88 = vector.load %arg8[%c56_42, %c0_43] : memref<72x512xf32, #tpu.memory_space<vmem>>, vector<8x512xf32>
    tpu.vector_store %arg8[%c56_42, %c0_43], %87 {strides = array<i32>} : memref<72x512xf32, #tpu.memory_space<vmem>>, vector<8x512xf32>,
    %c495_i32_44 = arith.constant 495 : i32
    %89 = tpu.dynamic_rotate %52 by %c495_i32_44 dim 1 : vector<8x512xf32>, i32 -> vector<8x512xf32>
    %90 = vector.extract_strided_slice %2 {offsets = [8, 0], sizes = [1, 512], strides = [1, 1]} : vector<9x512xf32> to vector<1x512xf32>
    %91 = vector.broadcast %90 : vector<1x512xf32> to vector<8x512xf32>
    %92 = arith.mulf %89, %91 : vector<8x512xf32>
    %c64_45 = arith.constant 64 : index
    %c0_46 = arith.constant 0 : index
    %93 = vector.load %arg8[%c64_45, %c0_46] : memref<72x512xf32, #tpu.memory_space<vmem>>, vector<8x512xf32>
    tpu.vector_store %arg8[%c64_45, %c0_46], %92 {strides = array<i32>} : memref<72x512xf32, #tpu.memory_space<vmem>>, vector<8x512xf32>,
    %c0_47 = arith.constant 0 : index
    %c0_48 = arith.constant 0 : index
    %94 = vector.load %arg8[%c0_47, %c0_48] : memref<72x512xf32, #tpu.memory_space<vmem>>, vector<72x512xf32>
    %95 = arith.truncf %94 : vector<72x512xf32> to vector<72x512xbf16>
    %c0_49 = arith.constant 0 : index
    %c0_50 = arith.constant 0 : index
    %96 = vector.load %arg5[%c0_49, %c0_50] : memref<8x72xbf16, #tpu.memory_space<vmem>>, vector<8x72xbf16>
    %cst_51 = arith.constant dense<0.000000e+00> : vector<8x512xf32>
    %97 = tpu.matmul %96, %95, %cst_51 {dimension_numbers = #tpu.dot_dimension_numbers<[1], [0], [0], [1], [0, 0, 1, 1], [], []>} : vector<8x72xbf16>, vector<72x512xbf16>, vector<8x512xf32> -> vector<8x512xf32>
    %c0_52 = arith.constant 0 : index
    %c0_53 = arith.constant 0 : index
    %98 = vector.load %arg6[%c0_52, %c0_53] : memref<8x1xf32, #tpu.memory_space<vmem>>, vector<8x1xf32>
    %99 = vector.broadcast %98 : vector<8x1xf32> to vector<8x512xf32>
    %100 = arith.addf %97, %99 : vector<8x512xf32>
    %101 = arith.addf %100, %1 : vector<8x512xf32>
    %c0_54 = arith.constant 0 : index
    %c0_55 = arith.constant 0 : index
    %c0_56 = arith.constant 0 : index
    %102 = vector.load %arg7[%c0_54, %c0_55, %c0_56] : memref<1x8x512xf32, #tpu.memory_space<vmem>>, vector<1x8x512xf32>
    %103 = vector.shape_cast %102 : vector<1x8x512xf32> to vector<8x512xf32>
    %104 = vector.shape_cast %101 : vector<8x512xf32> to vector<1x8x512xf32>
    tpu.vector_store %arg7[%c0_54, %c0_55, %c0_56], %104 {strides = array<i32>} : memref<1x8x512xf32, #tpu.memory_space<vmem>>, vector<1x8x512xf32>,
    return
  }
  func.func @transform_0(%arg0: i32) -> (i32, i32, i32) {
    %c0_i32 = arith.constant 0 : i32
    %c0_i32_0 = arith.constant 0 : i32
    %c0_i32_1 = arith.constant 0 : i32
    return %arg0, %c0_i32, %c0_i32_0 : i32, i32, i32
  }
  func.func @transform_1(%arg0: i32) -> (i32, i32) {
    %c0_i32 = arith.constant 0 : i32
    %c0_i32_0 = arith.constant 0 : i32
    %c0_i32_1 = arith.constant 0 : i32
    return %c0_i32, %c0_i32_0 : i32, i32
  }
  func.func @transform_2(%arg0: i32) -> (i32, i32) {
    %c0_i32 = arith.constant 0 : i32
    %c0_i32_0 = arith.constant 0 : i32
    %c0_i32_1 = arith.constant 0 : i32
    return %c0_i32, %c0_i32_0 : i32, i32
  }
  func.func @transform_3(%arg0: i32) -> (i32, i32) {
    %c0_i32 = arith.constant 0 : i32
    %c0_i32_0 = arith.constant 0 : i32
    %c0_i32_1 = arith.constant 0 : i32
    return %c0_i32, %c0_i32_0 : i32, i32
  }
  func.func @transform_4(%arg0: i32) -> (i32, i32) {
    %c0_i32 = arith.constant 0 : i32
    %c0_i32_0 = arith.constant 0 : i32
    %c0_i32_1 = arith.constant 0 : i32
    return %c0_i32, %c0_i32_0 : i32, i32
  }
  func.func @transform_5(%arg0: i32) -> (i32, i32) {
    %c0_i32 = arith.constant 0 : i32
    %c0_i32_0 = arith.constant 0 : i32
    %c0_i32_1 = arith.constant 0 : i32
    return %c0_i32, %c0_i32_0 : i32, i32
  }
  func.func @transform_6(%arg0: i32) -> (i32, i32, i32) {
    %c0_i32 = arith.constant 0 : i32
    %c0_i32_0 = arith.constant 0 : i32
    %c0_i32_1 = arith.constant 0 : i32
    return %arg0, %c0_i32, %c0_i32_0 : i32, i32, i32
  }
}

</mosaic_0001>

<llo_original>
// kernel: tpu_custom_call.1
$region0: #{tpu_custom_call.1}
  #allocation0 [shape = 'u32[]', space=smem, size = 0x4, offset = 0x4, fixed_abs, tag = 'smem constant byte address 0x4 - core index']
  #allocation1 [shape = 'u32[144,128]{1,0:T(1,128)}', space=vmem, size = 0x12000, scoped, tag = 'internal scratch']
  #allocation2 [shape = 'f32[72,512]{1,0:T(8,128)}', space=vmem, size = 0x24000, scoped, tag = 'scratch operand']
  %s0 = inlined_call_operand.hbm [shape: f32[2,8,512], index: 0, kind: input, shape index: {}]
  %s1 = inlined_call_operand.hbm [shape: f32[9,512], index: 1, kind: input, shape index: {}]
  %s2 = inlined_call_operand.vmem [shape: bf16[8,72], index: 2, kind: input, shape index: {}]
  %s3 = inlined_call_operand.vmem [shape: f32[8,1], index: 3, kind: input, shape index: {}]
  %s4 = inlined_call_operand.vmem [shape: bf16[8,72], index: 4, kind: input, shape index: {}]
  %s5 = inlined_call_operand.vmem [shape: f32[8,1], index: 5, kind: input, shape index: {}]
  %s6 = inlined_call_operand.hbm [shape: f32[2,8,512], index: 6, kind: output, shape index: {}]
  %s7 = sld [smem:[#allocation0]]
  $region65: #{tpu_custom_call.1} parent=0
    _
  %s9 = ssub.s32 1, %s7
  %s10 = scalar_select 0, %s9, %s7
  $region1: #{tpu_custom_call.1} parent=0
    #allocation3 [shape = 'u8[32768]{0}', space=vmem, size = 0x8000, scoped, tag = 'input window, operand 0']
    #allocation4 [shape = 's32[2]{0}', space=sflag, size = 0x8, scoped, tag = 'scoped memory for tpu_custom_call.1']
    #allocation5 [shape = 's32[2]{0}', space=sflag, size = 0x8, scoped, tag = 'scoped memory for tpu_custom_call.1']
    #allocation6 [shape = 'u8[32768]{0}', space=vmem, size = 0x8000, scoped, tag = 'input window, operand 1, single buffered']
    #allocation7 [shape = 's32[1]{0}', space=sflag, size = 0x4, scoped, tag = 'scoped memory for tpu_custom_call.1']
    #allocation8 [shape = 'u8[32768]{0}', space=vmem, size = 0x8000, scoped, tag = 'output window, operand 0']
    %11 = vsyncpa [#allocation4], 0
    %s12 = scalar_lea.sflag [#allocation4], 1
    %13 = vsyncpa %s12, 0
    %14 = vsyncpa [#allocation7], 0
    %15 = vsyncpa [#allocation5], 0
    %s16 = scalar_lea.sflag [#allocation5], 1
    %17 = vsyncpa %s16, 0
    loop: start=0, step=1, limit=4
    $region2: #{tpu_custom_call.1} parent=1 // loop_pre_header
      _
    $region3: #{tpu_custom_call.1} parent=1 // loop_header
      %s19 = sphi 0, %s23
      %p20 = scmp.ge.s32.totalorder %s19, 4
      %s29 = sphi 0, %s31
      %s32 = sphi 0, %s29
      %s33 = sphi 0, %s32
      %s49 = sphi 0, %s33
      %s53 = sphi 0, %s53
      %s55 = sphi 0, %s53
      %s56 = sphi 0, %s55
      %s70 = sphi 0, %s56
      %s74 = sphi 0, %s74
      %s76 = sphi 0, %s74
      %s77 = sphi 0, %s76
      %s91 = sphi 0, %s77
      %s95 = sphi 0, %s95
      %s97 = sphi 0, %s95
      %s98 = sphi 0, %s97
      %s112 = sphi 0, %s98
      %s116 = sphi 0, %s116
      %s118 = sphi 0, %s116
      %s119 = sphi 0, %s118
      %s133 = sphi 0, %s119
      %s137 = sphi 0, %s137
      %s139 = sphi 0, %s137
      %s140 = sphi 0, %s139
      %s154 = sphi 0, %s140
      %s160 = sphi 0, %s162
      %s163 = sphi 0, %s160
      %s164 = sphi 0, %s163
      %s180 = sphi 0, %s164
    $region4: #{tpu_custom_call.1} parent=1 // loop_header_branch
      %22 = sbr.rel (%p20) target = $region8
    $region5: #{tpu_custom_call.1} parent=1 // loop_body
      %s24 = ssub.s32 %s19, 1
      %s25 = ssub.s32 %s19, 2
      %s26 = sadd.s32 %s19, 1
      %s27 = ssub.s32 %s19, %s26
      %p28 = scmp.eq.s32.totalorder %s27, 0
      %s30 = sadd.s32 %s29, 1
      %s31 = scalar_select %p28, %s29, %s30
      %p34 = pneg %p28
      %p35 = scmp.eq.s32.totalorder %s19, 1
      %p36 = por %p34, %p35
      %p37 = scmp.ne.s32.totalorder %s29, %s32
      %p38 = scmp.eq.s32.totalorder %s19, 0
      %p39 = por %p37, %p38
      %p40 = scmp.ne.s32.totalorder %s29, %s32
      %p41 = scmp.eq.s32.totalorder %s24, 1
      %p42 = por %p40, %p41
      %p43 = scmp.ne.s32.totalorder %s32, %s33
      %p44 = scmp.eq.s32.totalorder %s24, 0
      %p45 = por %p43, %p44
      %p46 = scmp.ne.s32.totalorder %s32, %s33
      %p47 = scmp.eq.s32.totalorder %s25, 1
      %p48 = por %p46, %p47
      %p50 = scmp.ne.s32.totalorder %s33, %s49
      %p51 = scmp.eq.s32.totalorder %s25, 0
      %p52 = por %p50, %p51
      %s54 = sadd.s32 %s53, 1
      %p57 = scmp.eq.s32.totalorder %s19, 1
      %p58 = scmp.ne.s32.totalorder %s53, %s55
      %p59 = scmp.eq.s32.totalorder %s19, 0
      %p60 = por %p58, %p59
      %p61 = scmp.ne.s32.totalorder %s53, %s55
      %p62 = scmp.eq.s32.totalorder %s24, 1
      %p63 = por %p61, %p62
      %p64 = scmp.ne.s32.totalorder %s55, %s56
      %p65 = scmp.eq.s32.totalorder %s24, 0
      %p66 = por %p64, %p65
      %p67 = scmp.ne.s32.totalorder %s55, %s56
      %p68 = scmp.eq.s32.totalorder %s25, 1
      %p69 = por %p67, %p68
      %p71 = scmp.ne.s32.totalorder %s56, %s70
      %p72 = scmp.eq.s32.totalorder %s25, 0
      %p73 = por %p71, %p72
      %s75 = sadd.s32 %s74, 1
      %p78 = scmp.eq.s32.totalorder %s19, 1
      %p79 = scmp.ne.s32.totalorder %s74, %s76
      %p80 = scmp.eq.s32.totalorder %s19, 0
      %p81 = por %p79, %p80
      %p82 = scmp.ne.s32.totalorder %s74, %s76
      %p83 = scmp.eq.s32.totalorder %s24, 1
      %p84 = por %p82, %p83
      %p85 = scmp.ne.s32.totalorder %s76, %s77
      %p86 = scmp.eq.s32.totalorder %s24, 0
      %p87 = por %p85, %p86
      %p88 = scmp.ne.s32.totalorder %s76, %s77
      %p89 = scmp.eq.s32.totalorder %s25, 1
      %p90 = por %p88, %p89
      %p92 = scmp.ne.s32.totalorder %s77, %s91
      %p93 = scmp.eq.s32.totalorder %s25, 0
      %p94 = por %p92, %p93
      %s96 = sadd.s32 %s95, 1
      %p99 = scmp.eq.s32.totalorder %s19, 1
      %p100 = scmp.ne.s32.totalorder %s95, %s97
      %p101 = scmp.eq.s32.totalorder %s19, 0
      %p102 = por %p100, %p101
      %p103 = scmp.ne.s32.totalorder %s95, %s97
      %p104 = scmp.eq.s32.totalorder %s24, 1
      %p105 = por %p103, %p104
      %p106 = scmp.ne.s32.totalorder %s97, %s98
      %p107 = scmp.eq.s32.totalorder %s24, 0
      %p108 = por %p106, %p107
      %p109 = scmp.ne.s32.totalorder %s97, %s98
      %p110 = scmp.eq.s32.totalorder %s25, 1
      %p111 = por %p109, %p110
      %p113 = scmp.ne.s32.totalorder %s98, %s112
      %p114 = scmp.eq.s32.totalorder %s25, 0
      %p115 = por %p113, %p114
      %s117 = sadd.s32 %s116, 1
      %p120 = scmp.eq.s32.totalorder %s19, 1
      %p121 = scmp.ne.s32.totalorder %s116, %s118
      %p122 = scmp.eq.s32.totalorder %s19, 0
      %p123 = por %p121, %p122
      %p124 = scmp.ne.s32.totalorder %s116, %s118
      %p125 = scmp.eq.s32.totalorder %s24, 1
      %p126 = por %p124, %p125
      %p127 = scmp.ne.s32.totalorder %s118, %s119
      %p128 = scmp.eq.s32.totalorder %s24, 0
      %p129 = por %p127, %p128
      %p130 = scmp.ne.s32.totalorder %s118, %s119
      %p131 = scmp.eq.s32.totalorder %s25, 1
      %p132 = por %p130, %p131
      %p134 = scmp.ne.s32.totalorder %s119, %s133
      %p135 = scmp.eq.s32.totalorder %s25, 0
      %p136 = por %p134, %p135
      %s138 = sadd.s32 %s137, 1
      %p141 = scmp.eq.s32.totalorder %s19, 1
      %p142 = scmp.ne.s32.totalorder %s137, %s139
      %p143 = scmp.eq.s32.totalorder %s19, 0
      %p144 = por %p142, %p143
      %p145 = scmp.ne.s32.totalorder %s137, %s139
      %p146 = scmp.eq.s32.totalorder %s24, 1
      %p147 = por %p145, %p146
      %p148 = scmp.ne.s32.totalorder %s139, %s140
      %p149 = scmp.eq.s32.totalorder %s24, 0
      %p150 = por %p148, %p149
      %p151 = scmp.ne.s32.totalorder %s139, %s140
      %p152 = scmp.eq.s32.totalorder %s25, 1
      %p153 = por %p151, %p152
      %p155 = scmp.ne.s32.totalorder %s140, %s154
      %p156 = scmp.eq.s32.totalorder %s25, 0
      %p157 = por %p155, %p156
      %s158 = ssub.s32 %s19, %s26
      %p159 = scmp.eq.s32.totalorder %s158, 0
      %s161 = sadd.s32 %s160, 1
      %s162 = scalar_select %p159, %s160, %s161
      %p165 = pneg %p159
      %p166 = scmp.eq.s32.totalorder %s19, 1
      %p167 = por %p165, %p166
      %p168 = scmp.ne.s32.totalorder %s160, %s163
      %p169 = scmp.eq.s32.totalorder %s19, 0
      %p170 = por %p168, %p169
      %p171 = scmp.ne.s32.totalorder %s160, %s163
      %p172 = scmp.eq.s32.totalorder %s24, 1
      %p173 = por %p171, %p172
      %p174 = scmp.ne.s32.totalorder %s163, %s164
      %p175 = scmp.eq.s32.totalorder %s24, 0
      %p176 = por %p174, %p175
      %p177 = scmp.ne.s32.totalorder %s163, %s164
      %p178 = scmp.eq.s32.totalorder %s25, 1
      %p179 = por %p177, %p178
      %p181 = scmp.ne.s32.totalorder %s164, %s180
      %p182 = scmp.eq.s32.totalorder %s25, 0
      %p183 = por %p181, %p182
      %p184 = scmp.le.s32.totalorder 1, %s19
      %p185 = scmp.lt.s32.totalorder %s19, 3
      %p186 = pnand %p184, %p185
      %p187 = pneg %p186
      // Predicated region
      $region9: #{tpu_custom_call.1} parent=5 // pred_check
        _
      $region10: #{tpu_custom_call.1} parent=5 // pred_check_branch
        %189 = sbr.rel (%p186) target = $region12
      $region11: #{tpu_custom_call.1} parent=5 // pred_region
        %s190 = ssub.s32 %s19, 1
        // Predicated region
        $region13: #{tpu_custom_call.1} parent=11 // pred_check
          %p191 = pneg %p66
        $region14: #{tpu_custom_call.1} parent=11 // pred_check_branch
          %193 = sbr.rel (%p191) target = $region16
        $region15: #{tpu_custom_call.1} parent=11 // pred_region
          %s195 = ssub.s32 1024, 1024
          %196 = vsyncadd [#allocation7], %s195
          %s197 = sshll.u32 [#allocation6], 4
          %s198 = int_to_ptr.vmem [resolvable:$true] %s197
          %203 = dma.hbm_to_vmem [thread:$0]  %s1, 1024, %s198, [#allocation7], 512, 512, 32
        $region16: #{tpu_custom_call.1} parent=11 // pred_fallthru
          _
        // Predicated region
        $region17: #{tpu_custom_call.1} parent=11 // pred_check
          %p204 = pneg %p87
        $region18: #{tpu_custom_call.1} parent=11 // pred_check_branch
          %206 = sbr.rel (%p204) target = $region20
        $region19: #{tpu_custom_call.1} parent=11 // pred_region
          _
        $region20: #{tpu_custom_call.1} parent=11 // pred_fallthru
          _
        // Predicated region
        $region21: #{tpu_custom_call.1} parent=11 // pred_check
          %p207 = pneg %p108
        $region22: #{tpu_custom_call.1} parent=11 // pred_check_branch
          %209 = sbr.rel (%p207) target = $region24
        $region23: #{tpu_custom_call.1} parent=11 // pred_region
          _
        $region24: #{tpu_custom_call.1} parent=11 // pred_fallthru
          _
        // Predicated region
        $region25: #{tpu_custom_call.1} parent=11 // pred_check
          %p210 = pneg %p129
        $region26: #{tpu_custom_call.1} parent=11 // pred_check_branch
          %212 = sbr.rel (%p210) target = $region28
        $region27: #{tpu_custom_call.1} parent=11 // pred_region
          _
        $region28: #{tpu_custom_call.1} parent=11 // pred_fallthru
          _
        // Predicated region
        $region29: #{tpu_custom_call.1} parent=11 // pred_check
          %p213 = pneg %p150
        $region30: #{tpu_custom_call.1} parent=11 // pred_check_branch
          %215 = sbr.rel (%p213) target = $region32
        $region31: #{tpu_custom_call.1} parent=11 // pred_region
          _
        $region32: #{tpu_custom_call.1} parent=11 // pred_fallthru
          _
      $region12: #{tpu_custom_call.1} parent=5 // pred_fallthru
        _
      %p216 = scmp.lt.s32.totalorder %s19, 2
      // Predicated region
      $region33: #{tpu_custom_call.1} parent=5 // pred_check
        %p217 = pneg %p216
      $region34: #{tpu_custom_call.1} parent=5 // pred_check_branch
        %219 = sbr.rel (%p217) target = $region36
      $region35: #{tpu_custom_call.1} parent=5 // pred_region
        // Predicated region
        $region37: #{tpu_custom_call.1} parent=35 // pred_check
          %p220 = pneg %p39
        $region38: #{tpu_custom_call.1} parent=35 // pred_check_branch
          %222 = sbr.rel (%p220) target = $region40
        $region39: #{tpu_custom_call.1} parent=35 // pred_region
          %s223 = sand.u32 %s29, 1
          %s224 = scalar_lea.sflag [#allocation4], %s223
          %s225 = sand.u32 %s29, 1
          %s226 = smul.addr %s225, 32
          %s227 = scalar_lea.vmem [#allocation3], %s226
          %s229 = ssub.s32 512, 512
          %230 = vsyncadd %s224, %s229
          %s231 = smul.addr %s19, 4
          %s232 = smul.addr %s231, 128
          %s233 = scalar_lea.hbm %s0, %s232
          %s235 = sshll.u32 %s227, 4
          %s236 = int_to_ptr.vmem [resolvable:$true] %s235
          %238 = dma.hbm_to_vmem [thread:$0]  %s233, 512, %s236, %s224
        $region40: #{tpu_custom_call.1} parent=35 // pred_fallthru
          _
      $region36: #{tpu_custom_call.1} parent=5 // pred_fallthru
        _
      %p239 = scmp.le.s32.totalorder 1, %s19
      %p240 = scmp.lt.s32.totalorder %s19, 3
      %p241 = pnand %p239, %p240
      %p242 = pneg %p241
      // Predicated region
      $region41: #{tpu_custom_call.1} parent=5 // pred_check
        _
      $region42: #{tpu_custom_call.1} parent=5 // pred_check_branch
        %244 = sbr.rel (%p241) target = $region44
      $region43: #{tpu_custom_call.1} parent=5 // pred_region
        %s245 = ssub.s32 %s19, 1
        %s246 = sand.u32 %s32, 1
        %s247 = scalar_lea.sflag [#allocation4], %s246
        %s248 = sand.u32 %s32, 1
        %s249 = smul.addr %s248, 32
        %s250 = scalar_lea.vmem [#allocation3], %s249
        // Predicated region
        $region45: #{tpu_custom_call.1} parent=43 // pred_check
          %p251 = pneg %p45
        $region46: #{tpu_custom_call.1} parent=43 // pred_check_branch
          %253 = sbr.rel (%p251) target = $region48
        $region47: #{tpu_custom_call.1} parent=43 // pred_region
          %254 = dma.done %s247, 512
        $region48: #{tpu_custom_call.1} parent=43 // pred_fallthru
          _
        // Predicated region
        $region49: #{tpu_custom_call.1} parent=43 // pred_check
          %p255 = pneg %p66
        $region50: #{tpu_custom_call.1} parent=43 // pred_check_branch
          %257 = sbr.rel (%p255) target = $region52
        $region51: #{tpu_custom_call.1} parent=43 // pred_region
          %258 = dma.done [#allocation7], 1024
        $region52: #{tpu_custom_call.1} parent=43 // pred_fallthru
          _
        %s259 = sand.u32 %s32, 1
        %s260 = scalar_lea.sflag [#allocation4], %s259
        %s261 = sand.u32 %s32, 1
        %s262 = smul.addr %s261, 32
        %s263 = scalar_lea.vmem [#allocation3], %s262
        %p264 = pneg %p45
        %p265 = pneg %p42
        %p266 = pneg %p66
        %p267 = pneg %p63
        %p268 = pneg %p87
        %p269 = pneg %p84
        %p270 = pneg %p108
        %p271 = pneg %p105
        %p272 = pneg %p129
        %p273 = pneg %p126
        %p274 = pneg %p150
        %p275 = pneg %p147
        %p276 = pneg %p176
        %p277 = pneg %p173
        %s278 = sand.u32 %s163, 1
        %s279 = scalar_lea.sflag [#allocation5], %s278
        %s280 = sand.u32 %s163, 1
        %s281 = smul.addr %s280, 32
        %s282 = scalar_lea.vmem [#allocation8], %s281
        %v284 = vld [vmem:[%s250] sm:$0xff]
        %v285 = vld [vmem:[%s250 + $0x8] sm:$0xff]
        %v286 = vld [vmem:[%s250 + $0x10] sm:$0xff]
        %v287 = vld [vmem:[%s250 + $0x18] sm:$0xff]
        %v288 = vld [vmem:[#allocation6] sm:$0xff]
        %v289 = vld [vmem:[#allocation6 + $0x8] sm:$0xff]
        %v290 = vld [vmem:[#allocation6 + $0x10] sm:$0xff]
        %v291 = vld [vmem:[#allocation6 + $0x18] sm:$0xff]
        %v292 = vld [vmem:[#allocation6 + $0x20] sm:$0x1]
        %v293 = vld [vmem:[#allocation6 + $0x28] sm:$0x1]
        %v294 = vld [vmem:[#allocation6 + $0x30] sm:$0x1]
        %v295 = vld [vmem:[#allocation6 + $0x38] sm:$0x1]
        %296 = vrot.lane.b32.xlu0 %v284, 17
        %v297 = vpop.permute.xlu0 %296
        %298 = vrot.lane.b32.xlu0 %v285, 17
        %v299 = vpop.permute.xlu0 %298
        %300 = vrot.lane.b32.xlu0 %v286, 17
        %v301 = vpop.permute.xlu0 %300
        %302 = vrot.lane.b32.xlu0 %v287, 17
        %v303 = vpop.permute.xlu0 %302
        %v304 = vlaneseq
        %v305 = vand.u32 %v304, 127
        %vm306 = vcmp.lt.s32.totalorder %v305, 17
        %v307 = vsel %vm306, %v301, %v303
        %v308 = vsel %vm306, %v299, %v301
        %v309 = vsel %vm306, %v297, %v299
        %v310 = vsel %vm306, %v303, %v297
        %v311 = vlaneseq
        %v312 = vshrl.u32 %v311, 7
        %v313 = vsub.s32 0, %v312
        %v314 = vrot.slane %v288, %v313
        %v315 = vlaneseq
        %v316 = vshrl.u32 %v315, 7
        %v317 = vsub.s32 0, %v316
        %v318 = vrot.slane %v289, %v317
        %v319 = vlaneseq
        %v320 = vshrl.u32 %v319, 7
        %v321 = vsub.s32 0, %v320
        %v322 = vrot.slane %v290, %v321
        %v323 = vlaneseq
        %v324 = vshrl.u32 %v323, 7
        %v325 = vsub.s32 0, %v324
        %v326 = vrot.slane %v291, %v325
        %v327 = vmul.f32 %v310, %v314
        %v328 = vmul.f32 %v309, %v318
        %v329 = vmul.f32 %v308, %v322
        %v330 = vmul.f32 %v307, %v326
        %331 = vst [vmem:[#allocation2] sm:$0xff] %v327
        %332 = vst [vmem:[#allocation2 + $0x8] sm:$0xff] %v328
        %333 = vst [vmem:[#allocation2 + $0x10] sm:$0xff] %v329
        %334 = vst [vmem:[#allocation2 + $0x18] sm:$0xff] %v330
        %335 = vrot.lane.b32.xlu0 %v284, 16
        %v336 = vpop.permute.xlu0 %335
        %337 = vrot.lane.b32.xlu0 %v285, 16
        %v338 = vpop.permute.xlu0 %337
        %339 = vrot.lane.b32.xlu0 %v286, 16
        %v340 = vpop.permute.xlu0 %339
        %341 = vrot.lane.b32.xlu0 %v287, 16
        %v342 = vpop.permute.xlu0 %341
        %vm343 = vcmp.lt.s32.totalorder %v305, 16
        %v344 = vsel %vm343, %v340, %v342
        %v345 = vsel %vm343, %v338, %v340
        %v346 = vsel %vm343, %v336, %v338
        %v347 = vsel %vm343, %v342, %v336
        %v348 = vlaneseq
        %v349 = vshrl.u32 %v348, 7
        %v350 = vsub.s32 1, %v349
        %v351 = vrot.slane %v288, %v350
        %v352 = vlaneseq
        %v353 = vshrl.u32 %v352, 7
        %v354 = vsub.s32 1, %v353
        %v355 = vrot.slane %v289, %v354
        %v356 = vlaneseq
        %v357 = vshrl.u32 %v356, 7
        %v358 = vsub.s32 1, %v357
        %v359 = vrot.slane %v290, %v358
        %v360 = vlaneseq
        %v361 = vshrl.u32 %v360, 7
        %v362 = vsub.s32 1, %v361
        %v363 = vrot.slane %v291, %v362
        %v364 = vmul.f32 %v347, %v351
        %v365 = vmul.f32 %v346, %v355
        %v366 = vmul.f32 %v345, %v359
        %v367 = vmul.f32 %v344, %v363
        %368 = vst [vmem:[#allocation2 + $0x20] sm:$0xff] %v364
        %369 = vst [vmem:[#allocation2 + $0x28] sm:$0xff] %v365
        %370 = vst [vmem:[#allocation2 + $0x30] sm:$0xff] %v366
        %371 = vst [vmem:[#allocation2 + $0x38] sm:$0xff] %v367
        %372 = vrot.lane.b32.xlu0 %v284, 15
        %v373 = vpop.permute.xlu0 %372
        %374 = vrot.lane.b32.xlu0 %v285, 15
        %v375 = vpop.permute.xlu0 %374
        %376 = vrot.lane.b32.xlu0 %v286, 15
        %v377 = vpop.permute.xlu0 %376
        %378 = vrot.lane.b32.xlu0 %v287, 15
        %v379 = vpop.permute.xlu0 %378
        %vm380 = vcmp.lt.s32.totalorder %v305, 15
        %v381 = vsel %vm380, %v377, %v379
        %v382 = vsel %vm380, %v375, %v377
        %v383 = vsel %vm380, %v373, %v375
        %v384 = vsel %vm380, %v379, %v373
        %v385 = vlaneseq
        %v386 = vshrl.u32 %v385, 7
        %v387 = vsub.s32 2, %v386
        %v388 = vrot.slane %v288, %v387
        %v389 = vlaneseq
        %v390 = vshrl.u32 %v389, 7
        %v391 = vsub.s32 2, %v390
        %v392 = vrot.slane %v289, %v391
        %v393 = vlaneseq
        %v394 = vshrl.u32 %v393, 7
        %v395 = vsub.s32 2, %v394
        %v396 = vrot.slane %v290, %v395
        %v397 = vlaneseq
        %v398 = vshrl.u32 %v397, 7
        %v399 = vsub.s32 2, %v398
        %v400 = vrot.slane %v291, %v399
        %v401 = vmul.f32 %v384, %v388
        %v402 = vmul.f32 %v383, %v392
        %v403 = vmul.f32 %v382, %v396
        %v404 = vmul.f32 %v381, %v400
        %405 = vst [vmem:[#allocation2 + $0x40] sm:$0xff] %v401
        %406 = vst [vmem:[#allocation2 + $0x48] sm:$0xff] %v402
        %407 = vst [vmem:[#allocation2 + $0x50] sm:$0xff] %v403
        %408 = vst [vmem:[#allocation2 + $0x58] sm:$0xff] %v404
        %409 = vrot.lane.b32.xlu0 %v284, 1
        %v410 = vpop.permute.xlu0 %409
        %411 = vrot.lane.b32.xlu0 %v285, 1
        %v412 = vpop.permute.xlu0 %411
        %413 = vrot.lane.b32.xlu0 %v286, 1
        %v414 = vpop.permute.xlu0 %413
        %415 = vrot.lane.b32.xlu0 %v287, 1
        %v416 = vpop.permute.xlu0 %415
        %vm417 = vcmp.lt.s32.totalorder %v305, 1
        %v418 = vsel %vm417, %v414, %v416
        %v419 = vsel %vm417, %v412, %v414
        %v420 = vsel %vm417, %v410, %v412
        %v421 = vsel %vm417, %v416, %v410
        %v422 = vlaneseq
        %v423 = vshrl.u32 %v422, 7
        %v424 = vsub.s32 3, %v423
        %v425 = vrot.slane %v288, %v424
        %v426 = vlaneseq
        %v427 = vshrl.u32 %v426, 7
        %v428 = vsub.s32 3, %v427
        %v429 = vrot.slane %v289, %v428
        %v430 = vlaneseq
        %v431 = vshrl.u32 %v430, 7
        %v432 = vsub.s32 3, %v431
        %v433 = vrot.slane %v290, %v432
        %v434 = vlaneseq
        %v435 = vshrl.u32 %v434, 7
        %v436 = vsub.s32 3, %v435
        %v437 = vrot.slane %v291, %v436
        %v438 = vmul.f32 %v421, %v425
        %v439 = vmul.f32 %v420, %v429
        %v440 = vmul.f32 %v419, %v433
        %v441 = vmul.f32 %v418, %v437
        %442 = vst [vmem:[#allocation2 + $0x60] sm:$0xff] %v438
        %443 = vst [vmem:[#allocation2 + $0x68] sm:$0xff] %v439
        %444 = vst [vmem:[#allocation2 + $0x70] sm:$0xff] %v440
        %445 = vst [vmem:[#allocation2 + $0x78] sm:$0xff] %v441
        %446 = vst [vmem:[#allocation2 + $0x80] sm:$0xff] %v284
        %447 = vst [vmem:[#allocation2 + $0x88] sm:$0xff] %v285
        %448 = vst [vmem:[#allocation2 + $0x90] sm:$0xff] %v286
        %449 = vst [vmem:[#allocation2 + $0x98] sm:$0xff] %v287
        %450 = vrot.lane.b32.xlu0 %v284, 127
        %v451 = vpop.permute.xlu0 %450
        %452 = vrot.lane.b32.xlu0 %v285, 127
        %v453 = vpop.permute.xlu0 %452
        %454 = vrot.lane.b32.xlu0 %v286, 127
        %v455 = vpop.permute.xlu0 %454
        %456 = vrot.lane.b32.xlu0 %v287, 127
        %v457 = vpop.permute.xlu0 %456
        %vm458 = vcmp.lt.s32.totalorder %v305, 127
        %v459 = vsel %vm458, %v455, %v457
        %v460 = vsel %vm458, %v453, %v455
        %v461 = vsel %vm458, %v451, %v453
        %v462 = vsel %vm458, %v457, %v451
        %v463 = vlaneseq
        %v464 = vshrl.u32 %v463, 7
        %v465 = vsub.s32 5, %v464
        %v466 = vrot.slane %v288, %v465
        %v467 = vlaneseq
        %v468 = vshrl.u32 %v467, 7
        %v469 = vsub.s32 5, %v468
        %v470 = vrot.slane %v289, %v469
        %v471 = vlaneseq
        %v472 = vshrl.u32 %v471, 7
        %v473 = vsub.s32 5, %v472
        %v474 = vrot.slane %v290, %v473
        %v475 = vlaneseq
        %v476 = vshrl.u32 %v475, 7
        %v477 = vsub.s32 5, %v476
        %v478 = vrot.slane %v291, %v477
        %v479 = vmul.f32 %v461, %v466
        %v480 = vmul.f32 %v460, %v470
        %v481 = vmul.f32 %v459, %v474
        %v482 = vmul.f32 %v462, %v478
        %483 = vst [vmem:[#allocation2 + $0xa0] sm:$0xff] %v479
        %484 = vst [vmem:[#allocation2 + $0xa8] sm:$0xff] %v480
        %485 = vst [vmem:[#allocation2 + $0xb0] sm:$0xff] %v481
        %486 = vst [vmem:[#allocation2 + $0xb8] sm:$0xff] %v482
        %487 = vrot.lane.b32.xlu0 %v284, 113
        %v488 = vpop.permute.xlu0 %487
        %489 = vrot.lane.b32.xlu0 %v285, 113
        %v490 = vpop.permute.xlu0 %489
        %491 = vrot.lane.b32.xlu0 %v286, 113
        %v492 = vpop.permute.xlu0 %491
        %493 = vrot.lane.b32.xlu0 %v287, 113
        %v494 = vpop.permute.xlu0 %493
        %vm495 = vcmp.lt.s32.totalorder %v305, 113
        %v496 = vsel %vm495, %v492, %v494
        %v497 = vsel %vm495, %v490, %v492
        %v498 = vsel %vm495, %v488, %v490
        %v499 = vsel %vm495, %v494, %v488
        %v500 = vlaneseq
        %v501 = vshrl.u32 %v500, 7
        %v502 = vsub.s32 6, %v501
        %v503 = vrot.slane %v288, %v502
        %v504 = vlaneseq
        %v505 = vshrl.u32 %v504, 7
        %v506 = vsub.s32 6, %v505
        %v507 = vrot.slane %v289, %v506
        %v508 = vlaneseq
        %v509 = vshrl.u32 %v508, 7
        %v510 = vsub.s32 6, %v509
        %v511 = vrot.slane %v290, %v510
        %v512 = vlaneseq
        %v513 = vshrl.u32 %v512, 7
        %v514 = vsub.s32 6, %v513
        %v515 = vrot.slane %v291, %v514
        %v516 = vmul.f32 %v498, %v503
        %v517 = vmul.f32 %v497, %v507
        %v518 = vmul.f32 %v496, %v511
        %v519 = vmul.f32 %v499, %v515
        %520 = vst [vmem:[#allocation2 + $0xc0] sm:$0xff] %v516
        %521 = vst [vmem:[#allocation2 + $0xc8] sm:$0xff] %v517
        %522 = vst [vmem:[#allocation2 + $0xd0] sm:$0xff] %v518
        %523 = vst [vmem:[#allocation2 + $0xd8] sm:$0xff] %v519
        %524 = vrot.lane.b32.xlu0 %v284, 112
        %v525 = vpop.permute.xlu0 %524
        %526 = vrot.lane.b32.xlu0 %v285, 112
        %v527 = vpop.permute.xlu0 %526
        %528 = vrot.lane.b32.xlu0 %v286, 112
        %v529 = vpop.permute.xlu0 %528
        %530 = vrot.lane.b32.xlu0 %v287, 112
        %v531 = vpop.permute.xlu0 %530
        %vm532 = vcmp.lt.s32.totalorder %v305, 112
        %v533 = vsel %vm532, %v529, %v531
        %v534 = vsel %vm532, %v527, %v529
        %v535 = vsel %vm532, %v525, %v527
        %v536 = vsel %vm532, %v531, %v525
        %v537 = vlaneseq
        %v538 = vshrl.u32 %v537, 7
        %v539 = vsub.s32 7, %v538
        %v540 = vrot.slane %v288, %v539
        %v541 = vlaneseq
        %v542 = vshrl.u32 %v541, 7
        %v543 = vsub.s32 7, %v542
        %v544 = vrot.slane %v289, %v543
        %v545 = vlaneseq
        %v546 = vshrl.u32 %v545, 7
        %v547 = vsub.s32 7, %v546
        %v548 = vrot.slane %v290, %v547
        %v549 = vlaneseq
        %v550 = vshrl.u32 %v549, 7
        %v551 = vsub.s32 7, %v550
        %v552 = vrot.slane %v291, %v551
        %v553 = vmul.f32 %v535, %v540
        %v554 = vmul.f32 %v534, %v544
        %v555 = vmul.f32 %v533, %v548
        %v556 = vmul.f32 %v536, %v552
        %557 = vst [vmem:[#allocation2 + $0xe0] sm:$0xff] %v553
        %558 = vst [vmem:[#allocation2 + $0xe8] sm:$0xff] %v554
        %559 = vst [vmem:[#allocation2 + $0xf0] sm:$0xff] %v555
        %560 = vst [vmem:[#allocation2 + $0xf8] sm:$0xff] %v556
        %561 = vrot.lane.b32.xlu0 %v284, 111
        %v562 = vpop.permute.xlu0 %561
        %563 = vrot.lane.b32.xlu0 %v285, 111
        %v564 = vpop.permute.xlu0 %563
        %565 = vrot.lane.b32.xlu0 %v286, 111
        %v566 = vpop.permute.xlu0 %565
        %567 = vrot.lane.b32.xlu0 %v287, 111
        %v568 = vpop.permute.xlu0 %567
        %vm569 = vcmp.lt.s32.totalorder %v305, 111
        %v570 = vsel %vm569, %v566, %v568
        %v571 = vsel %vm569, %v564, %v566
        %v572 = vsel %vm569, %v562, %v564
        %v573 = vsel %vm569, %v568, %v562
        %v574 = vlaneseq
        %v575 = vshrl.u32 %v574, 7
        %v576 = vsub.s32 0, %v575
        %v577 = vrot.slane %v292, %v576
        %v578 = vlaneseq
        %v579 = vshrl.u32 %v578, 7
        %v580 = vsub.s32 0, %v579
        %v581 = vrot.slane %v293, %v580
        %v582 = vlaneseq
        %v583 = vshrl.u32 %v582, 7
        %v584 = vsub.s32 0, %v583
        %v585 = vrot.slane %v294, %v584
        %v586 = vlaneseq
        %v587 = vshrl.u32 %v586, 7
        %v588 = vsub.s32 0, %v587
        %v589 = vrot.slane %v295, %v588
        %v590 = vmul.f32 %v572, %v577
        %v591 = vmul.f32 %v571, %v581
        %v592 = vmul.f32 %v570, %v585
        %v593 = vmul.f32 %v573, %v589
        %594 = vst [vmem:[#allocation2 + $0x100] sm:$0xff] %v590
        %595 = vst [vmem:[#allocation2 + $0x108] sm:$0xff] %v591
        %596 = vst [vmem:[#allocation2 + $0x110] sm:$0xff] %v592
        %597 = vst [vmem:[#allocation2 + $0x118] sm:$0xff] %v593
        %v598 = vld [vmem:[#allocation2] sm:$0xff]
        %v599 = vld [vmem:[#allocation2 + $0x8] sm:$0xff]
        %v600 = vld [vmem:[#allocation2 + $0x10] sm:$0xff]
        %v601 = vld [vmem:[#allocation2 + $0x18] sm:$0xff]
        %v602 = vld [vmem:[#allocation2 + $0x20] sm:$0xff]
        %v603 = vld [vmem:[#allocation2 + $0x28] sm:$0xff]
        %v604 = vld [vmem:[#allocation2 + $0x30] sm:$0xff]
        %v605 = vld [vmem:[#allocation2 + $0x38] sm:$0xff]
        %v606 = vld [vmem:[#allocation2 + $0x40] sm:$0xff]
        %v607 = vld [vmem:[#allocation2 + $0x48] sm:$0xff]
        %v608 = vld [vmem:[#allocation2 + $0x50] sm:$0xff]
        %v609 = vld [vmem:[#allocation2 + $0x58] sm:$0xff]
        %v610 = vld [vmem:[#allocation2 + $0x60] sm:$0xff]
        %v611 = vld [vmem:[#allocation2 + $0x68] sm:$0xff]
        %v612 = vld [vmem:[#allocation2 + $0x70] sm:$0xff]
        %v613 = vld [vmem:[#allocation2 + $0x78] sm:$0xff]
        %v614 = vld [vmem:[#allocation2 + $0x80] sm:$0xff]
        %v615 = vld [vmem:[#allocation2 + $0x88] sm:$0xff]
        %v616 = vld [vmem:[#allocation2 + $0x90] sm:$0xff]
        %v617 = vld [vmem:[#allocation2 + $0x98] sm:$0xff]
        %v618 = vld [vmem:[#allocation2 + $0xa0] sm:$0xff]
        %v619 = vld [vmem:[#allocation2 + $0xa8] sm:$0xff]
        %v620 = vld [vmem:[#allocation2 + $0xb0] sm:$0xff]
        %v621 = vld [vmem:[#allocation2 + $0xb8] sm:$0xff]
        %v622 = vld [vmem:[#allocation2 + $0xc0] sm:$0xff]
        %v623 = vld [vmem:[#allocation2 + $0xc8] sm:$0xff]
        %v624 = vld [vmem:[#allocation2 + $0xd0] sm:$0xff]
        %v625 = vld [vmem:[#allocation2 + $0xd8] sm:$0xff]
        %v626 = vld [vmem:[#allocation2 + $0xe0] sm:$0xff]
        %v627 = vld [vmem:[#allocation2 + $0xe8] sm:$0xff]
        %v628 = vld [vmem:[#allocation2 + $0xf0] sm:$0xff]
        %v629 = vld [vmem:[#allocation2 + $0xf8] sm:$0xff]
        %v630 = vld [vmem:[#allocation2 + $0x100] sm:$0xff]
        %v631 = vld [vmem:[#allocation2 + $0x108] sm:$0xff]
        %v632 = vld [vmem:[#allocation2 + $0x110] sm:$0xff]
        %v633 = vld [vmem:[#allocation2 + $0x118] sm:$0xff]
        %v634 = vpack.c.bf16 %v602, %v598
        %v635 = vpack.c.bf16 %v603, %v599
        %v636 = vpack.c.bf16 %v604, %v600
        %v637 = vpack.c.bf16 %v605, %v601
        %v638 = vpack.c.bf16 %v610, %v606
        %v639 = vpack.c.bf16 %v611, %v607
        %v640 = vpack.c.bf16 %v612, %v608
        %v641 = vpack.c.bf16 %v613, %v609
        %v642 = vpack.c.bf16 %v618, %v614
        %v643 = vpack.c.bf16 %v619, %v615
        %v644 = vpack.c.bf16 %v620, %v616
        %v645 = vpack.c.bf16 %v621, %v617
        %v646 = vpack.c.bf16 %v626, %v622
        %v647 = vpack.c.bf16 %v627, %v623
        %v648 = vpack.c.bf16 %v628, %v624
        %v649 = vpack.c.bf16 %v629, %v625
        %v650 = vpack.c.bf16 %v630, %v630
        %v651 = vpack.c.bf16 %v631, %v631
        %v652 = vpack.c.bf16 %v632, %v632
        %v653 = vpack.c.bf16 %v633, %v633
        %v654 = vld [vmem:[%s2] sm:$0xf]
        %v655 = vld [vmem:[%s3] sm:$0xff]
        %657 = vset.pattern.permute.xlu0 0
        %658 = vperm.xlu0 %657, %v655
        %v659 = vpop.permute.xlu0 %658
        %vm661 = vcmask 588800
        %v663 = vsel %vm661, %v654, 0
        %vm665 = vcmask 1043456
        %v667 = vsel %vm665, %v650, 0
        %v670 = vsel %vm665, %v651, 0
        %v673 = vsel %vm665, %v652, 0
        %v676 = vsel %vm665, %v653, 0
        %678 = vmatprep.subr.bf16.mxu0 %v635
        %679 = vmatpush1.bf16.msra.mxu0 %v634
        %680 = vmatprep.subr.bf16.mxu0 %v639
        %681 = vmatpush1.bf16.msra.mxu0 %v638
        %682 = vmatprep.subr.bf16.mxu0 %v643
        %683 = vmatpush1.bf16.msra.mxu0 %v642
        %684 = vmatprep.subr.bf16.mxu0 %v647
        %685 = vmatpush1.bf16.msra.mxu0 %v646
        %686 = vmatprep.subr.bf16.mxu0 %v670
        %687 = vmatpush1.bf16.msra.mxu0 %v667
        %688 = vmatprep.subr.bf16.mxu0 0
        %689 = vmatpush1.bf16.msra.mxu0 0
        %690 = vmatprep.subr.bf16.mxu0 0
        %691 = vmatpush1.bf16.msra.mxu0 0
        %692 = vmatprep.subr.bf16.mxu0 0
        %693 = vmatpush1.bf16.msra.mxu0 0
        %694 = vmatprep.subr.bf16.mxu0 0
        %695 = vmatpush1.bf16.msra.mxu0 0
        %696 = vmatprep.subr.bf16.mxu0 0
        %697 = vmatpush1.bf16.msra.mxu0 0
        %698 = vmatprep.subr.bf16.mxu0 0
        %699 = vmatpush1.bf16.msra.mxu0 0
        %700 = vmatprep.subr.bf16.mxu0 0
        %701 = vmatpush1.bf16.msra.mxu0 0
        %702 = vmatprep.subr.bf16.mxu0 0
        %703 = vmatpush1.bf16.msra.mxu0 0
        %704 = vmatprep.subr.bf16.mxu0 0
        %705 = vmatpush1.bf16.msra.mxu0 0
        %706 = vmatprep.subr.bf16.mxu0 0
        %707 = vmatpush1.bf16.msra.mxu0 0
        %708 = vmatprep.subr.bf16.mxu0 0
        %709 = vmatpush1.bf16.msra.mxu0 0
        %710 = vmatprep.mubr.bf16.mxu0 0
        %711 = vmatmul.mubr.bf16.gmra.mrb[0].mxu0 %v663
        %v712 = vpop.f32.mrb[0].mxu0
        %v713 = vadd.f32 %v659, %v712
        %v714 = vpop.f32.mrb[0].mxu0
        %v715 = vadd.f32 %v659, %v714
        %v716 = vpop.f32.mrb[0].mxu0
        %v717 = vpop.f32.mrb[0].mxu0
        %718 = vdwg.mxu0
        %719 = vmatprep.subr.bf16.mxu0 %v637
        %720 = vmatpush1.bf16.msra.mxu0 %v636
        %721 = vmatprep.subr.bf16.mxu0 %v641
        %722 = vmatpush1.bf16.msra.mxu0 %v640
        %723 = vmatprep.subr.bf16.mxu0 %v645
        %724 = vmatpush1.bf16.msra.mxu0 %v644
        %725 = vmatprep.subr.bf16.mxu0 %v649
        %726 = vmatpush1.bf16.msra.mxu0 %v648
        %727 = vmatprep.subr.bf16.mxu0 %v676
        %728 = vmatpush1.bf16.msra.mxu0 %v673
        %729 = vmatprep.subr.bf16.mxu0 0
        %730 = vmatpush1.bf16.msra.mxu0 0
        %731 = vmatprep.subr.bf16.mxu0 0
        %732 = vmatpush1.bf16.msra.mxu0 0
        %733 = vmatprep.subr.bf16.mxu0 0
        %734 = vmatpush1.bf16.msra.mxu0 0
        %735 = vmatprep.subr.bf16.mxu0 0
        %736 = vmatpush1.bf16.msra.mxu0 0
        %737 = vmatprep.subr.bf16.mxu0 0
        %738 = vmatpush1.bf16.msra.mxu0 0
        %739 = vmatprep.subr.bf16.mxu0 0
        %740 = vmatpush1.bf16.msra.mxu0 0
        %741 = vmatprep.subr.bf16.mxu0 0
        %742 = vmatpush1.bf16.msra.mxu0 0
        %743 = vmatprep.subr.bf16.mxu0 0
        %744 = vmatpush1.bf16.msra.mxu0 0
        %745 = vmatprep.subr.bf16.mxu0 0
        %746 = vmatpush1.bf16.msra.mxu0 0
        %747 = vmatprep.subr.bf16.mxu0 0
        %748 = vmatpush1.bf16.msra.mxu0 0
        %749 = vmatprep.subr.bf16.mxu0 0
        %750 = vmatpush1.bf16.msra.mxu0 0
        %751 = vmatprep.mubr.bf16.mxu0 0
        %752 = vmatmul.mubr.bf16.gmra.mrb[0].mxu0 %v663
        %v753 = vpop.f32.mrb[0].mxu0
        %v754 = vadd.f32 %v659, %v753
        %v755 = vpop.f32.mrb[0].mxu0
        %v756 = vadd.f32 %v659, %v755
        %v757 = vpop.f32.mrb[0].mxu0
        %v758 = vpop.f32.mrb[0].mxu0
        %759 = vdwg.mxu0
        %v760 = vmax.f32 %v713, 0.0
        %v761 = vmax.f32 %v715, 0.0
        %v762 = vmax.f32 %v754, 0.0
        %v763 = vmax.f32 %v756, 0.0
        %764 = vrot.lane.b32.xlu0 %v760, 17
        %v765 = vpop.permute.xlu0 %764
        %766 = vrot.lane.b32.xlu0 %v761, 17
        %v767 = vpop.permute.xlu0 %766
        %768 = vrot.lane.b32.xlu0 %v762, 17
        %v769 = vpop.permute.xlu0 %768
        %770 = vrot.lane.b32.xlu0 %v763, 17
        %v771 = vpop.permute.xlu0 %770
        %v772 = vsel %vm306, %v769, %v771
        %v773 = vsel %vm306, %v767, %v769
        %v774 = vsel %vm306, %v765, %v767
        %v775 = vsel %vm306, %v771, %v765
        %v776 = vmul.f32 %v775, %v314
        %v777 = vmul.f32 %v774, %v318
        %v778 = vmul.f32 %v773, %v322
        %v779 = vmul.f32 %v772, %v326
        %780 = vst [vmem:[#allocation2] sm:$0xff] %v776
        %781 = vst [vmem:[#allocation2 + $0x8] sm:$0xff] %v777
        %782 = vst [vmem:[#allocation2 + $0x10] sm:$0xff] %v778
        %783 = vst [vmem:[#allocation2 + $0x18] sm:$0xff] %v779
        %784 = vrot.lane.b32.xlu0 %v760, 16
        %v785 = vpop.permute.xlu0 %784
        %786 = vrot.lane.b32.xlu0 %v761, 16
        %v787 = vpop.permute.xlu0 %786
        %788 = vrot.lane.b32.xlu0 %v762, 16
        %v789 = vpop.permute.xlu0 %788
        %790 = vrot.lane.b32.xlu0 %v763, 16
        %v791 = vpop.permute.xlu0 %790
        %v792 = vsel %vm343, %v789, %v791
        %v793 = vsel %vm343, %v787, %v789
        %v794 = vsel %vm343, %v785, %v787
        %v795 = vsel %vm343, %v791, %v785
        %v796 = vmul.f32 %v795, %v351
        %v797 = vmul.f32 %v794, %v355
        %v798 = vmul.f32 %v793, %v359
        %v799 = vmul.f32 %v792, %v363
        %800 = vst [vmem:[#allocation2 + $0x20] sm:$0xff] %v796
        %801 = vst [vmem:[#allocation2 + $0x28] sm:$0xff] %v797
        %802 = vst [vmem:[#allocation2 + $0x30] sm:$0xff] %v798
        %803 = vst [vmem:[#allocation2 + $0x38] sm:$0xff] %v799
        %804 = vrot.lane.b32.xlu0 %v760, 15
        %v805 = vpop.permute.xlu0 %804
        %806 = vrot.lane.b32.xlu0 %v761, 15
        %v807 = vpop.permute.xlu0 %806
        %808 = vrot.lane.b32.xlu0 %v762, 15
        %v809 = vpop.permute.xlu0 %808
        %810 = vrot.lane.b32.xlu0 %v763, 15
        %v811 = vpop.permute.xlu0 %810
        %v812 = vsel %vm380, %v809, %v811
        %v813 = vsel %vm380, %v807, %v809
        %v814 = vsel %vm380, %v805, %v807
        %v815 = vsel %vm380, %v811, %v805
        %v816 = vmul.f32 %v815, %v388
        %v817 = vmul.f32 %v814, %v392
        %v818 = vmul.f32 %v813, %v396
        %v819 = vmul.f32 %v812, %v400
        %820 = vst [vmem:[#allocation2 + $0x40] sm:$0xff] %v816
        %821 = vst [vmem:[#allocation2 + $0x48] sm:$0xff] %v817
        %822 = vst [vmem:[#allocation2 + $0x50] sm:$0xff] %v818
        %823 = vst [vmem:[#allocation2 + $0x58] sm:$0xff] %v819
        %824 = vrot.lane.b32.xlu0 %v760, 1
        %v825 = vpop.permute.xlu0 %824
        %826 = vrot.lane.b32.xlu0 %v761, 1
        %v827 = vpop.permute.xlu0 %826
        %828 = vrot.lane.b32.xlu0 %v762, 1
        %v829 = vpop.permute.xlu0 %828
        %830 = vrot.lane.b32.xlu0 %v763, 1
        %v831 = vpop.permute.xlu0 %830
        %v832 = vsel %vm417, %v829, %v831
        %v833 = vsel %vm417, %v827, %v829
        %v834 = vsel %vm417, %v825, %v827
        %v835 = vsel %vm417, %v831, %v825
        %v836 = vmul.f32 %v835, %v425
        %v837 = vmul.f32 %v834, %v429
        %v838 = vmul.f32 %v833, %v433
        %v839 = vmul.f32 %v832, %v437
        %840 = vst [vmem:[#allocation2 + $0x60] sm:$0xff] %v836
        %841 = vst [vmem:[#allocation2 + $0x68] sm:$0xff] %v837
        %842 = vst [vmem:[#allocation2 + $0x70] sm:$0xff] %v838
        %843 = vst [vmem:[#allocation2 + $0x78] sm:$0xff] %v839
        %844 = vst [vmem:[#allocation2 + $0x80] sm:$0xff] %v760
        %845 = vst [vmem:[#allocation2 + $0x88] sm:$0xff] %v761
        %846 = vst [vmem:[#allocation2 + $0x90] sm:$0xff] %v762
        %847 = vst [vmem:[#allocation2 + $0x98] sm:$0xff] %v763
        %848 = vrot.lane.b32.xlu0 %v760, 127
        %v849 = vpop.permute.xlu0 %848
        %850 = vrot.lane.b32.xlu0 %v761, 127
        %v851 = vpop.permute.xlu0 %850
        %852 = vrot.lane.b32.xlu0 %v762, 127
        %v853 = vpop.permute.xlu0 %852
        %854 = vrot.lane.b32.xlu0 %v763, 127
        %v855 = vpop.permute.xlu0 %854
        %v856 = vsel %vm458, %v853, %v855
        %v857 = vsel %vm458, %v851, %v853
        %v858 = vsel %vm458, %v849, %v851
        %v859 = vsel %vm458, %v855, %v849
        %v860 = vmul.f32 %v858, %v466
        %v861 = vmul.f32 %v857, %v470
        %v862 = vmul.f32 %v856, %v474
        %v863 = vmul.f32 %v859, %v478
        %864 = vst [vmem:[#allocation2 + $0xa0] sm:$0xff] %v860
        %865 = vst [vmem:[#allocation2 + $0xa8] sm:$0xff] %v861
        %866 = vst [vmem:[#allocation2 + $0xb0] sm:$0xff] %v862
        %867 = vst [vmem:[#allocation2 + $0xb8] sm:$0xff] %v863
        %868 = vrot.lane.b32.xlu0 %v760, 113
        %v869 = vpop.permute.xlu0 %868
        %870 = vrot.lane.b32.xlu0 %v761, 113
        %v871 = vpop.permute.xlu0 %870
        %872 = vrot.lane.b32.xlu0 %v762, 113
        %v873 = vpop.permute.xlu0 %872
        %874 = vrot.lane.b32.xlu0 %v763, 113
        %v875 = vpop.permute.xlu0 %874
        %v876 = vsel %vm495, %v873, %v875
        %v877 = vsel %vm495, %v871, %v873
        %v878 = vsel %vm495, %v869, %v871
        %v879 = vsel %vm495, %v875, %v869
        %v880 = vmul.f32 %v878, %v503
        %v881 = vmul.f32 %v877, %v507
        %v882 = vmul.f32 %v876, %v511
        %v883 = vmul.f32 %v879, %v515
        %884 = vst [vmem:[#allocation2 + $0xc0] sm:$0xff] %v880
        %885 = vst [vmem:[#allocation2 + $0xc8] sm:$0xff] %v881
        %886 = vst [vmem:[#allocation2 + $0xd0] sm:$0xff] %v882
        %887 = vst [vmem:[#allocation2 + $0xd8] sm:$0xff] %v883
        %888 = vrot.lane.b32.xlu0 %v760, 112
        %v889 = vpop.permute.xlu0 %888
        %890 = vrot.lane.b32.xlu0 %v761, 112
        %v891 = vpop.permute.xlu0 %890
        %892 = vrot.lane.b32.xlu0 %v762, 112
        %v893 = vpop.permute.xlu0 %892
        %894 = vrot.lane.b32.xlu0 %v763, 112
        %v895 = vpop.permute.xlu0 %894
        %v896 = vsel %vm532, %v893, %v895
        %v897 = vsel %vm532, %v891, %v893
        %v898 = vsel %vm532, %v889, %v891
        %v899 = vsel %vm532, %v895, %v889
        %v900 = vmul.f32 %v898, %v540
        %v901 = vmul.f32 %v897, %v544
        %v902 = vmul.f32 %v896, %v548
        %v903 = vmul.f32 %v899, %v552
        %904 = vst [vmem:[#allocation2 + $0xe0] sm:$0xff] %v900
        %905 = vst [vmem:[#allocation2 + $0xe8] sm:$0xff] %v901
        %906 = vst [vmem:[#allocation2 + $0xf0] sm:$0xff] %v902
        %907 = vst [vmem:[#allocation2 + $0xf8] sm:$0xff] %v903
        %908 = vrot.lane.b32.xlu0 %v760, 111
        %v909 = vpop.permute.xlu0 %908
        %910 = vrot.lane.b32.xlu0 %v761, 111
        %v911 = vpop.permute.xlu0 %910
        %912 = vrot.lane.b32.xlu0 %v762, 111
        %v913 = vpop.permute.xlu0 %912
        %914 = vrot.lane.b32.xlu0 %v763, 111
        %v915 = vpop.permute.xlu0 %914
        %v916 = vsel %vm569, %v913, %v915
        %v917 = vsel %vm569, %v911, %v913
        %v918 = vsel %vm569, %v909, %v911
        %v919 = vsel %vm569, %v915, %v909
        %v920 = vmul.f32 %v918, %v577
        %v921 = vmul.f32 %v917, %v581
        %v922 = vmul.f32 %v916, %v585
        %v923 = vmul.f32 %v919, %v589
        %924 = vst [vmem:[#allocation2 + $0x100] sm:$0xff] %v920
        %925 = vst [vmem:[#allocation2 + $0x108] sm:$0xff] %v921
        %926 = vst [vmem:[#allocation2 + $0x110] sm:$0xff] %v922
        %927 = vst [vmem:[#allocation2 + $0x118] sm:$0xff] %v923
        %v928 = vld [vmem:[#allocation2] sm:$0xff]
        %v929 = vld [vmem:[#allocation2 + $0x8] sm:$0xff]
        %v930 = vld [vmem:[#allocation2 + $0x10] sm:$0xff]
        %v931 = vld [vmem:[#allocation2 + $0x18] sm:$0xff]
        %v932 = vld [vmem:[#allocation2 + $0x20] sm:$0xff]
        %v933 = vld [vmem:[#allocation2 + $0x28] sm:$0xff]
        %v934 = vld [vmem:[#allocation2 + $0x30] sm:$0xff]
        %v935 = vld [vmem:[#allocation2 + $0x38] sm:$0xff]
        %v936 = vld [vmem:[#allocation2 + $0x40] sm:$0xff]
        %v937 = vld [vmem:[#allocation2 + $0x48] sm:$0xff]
        %v938 = vld [vmem:[#allocation2 + $0x50] sm:$0xff]
        %v939 = vld [vmem:[#allocation2 + $0x58] sm:$0xff]
        %v940 = vld [vmem:[#allocation2 + $0x60] sm:$0xff]
        %v941 = vld [vmem:[#allocation2 + $0x68] sm:$0xff]
        %v942 = vld [vmem:[#allocation2 + $0x70] sm:$0xff]
        %v943 = vld [vmem:[#allocation2 + $0x78] sm:$0xff]
        %v944 = vld [vmem:[#allocation2 + $0x80] sm:$0xff]
        %v945 = vld [vmem:[#allocation2 + $0x88] sm:$0xff]
        %v946 = vld [vmem:[#allocation2 + $0x90] sm:$0xff]
        %v947 = vld [vmem:[#allocation2 + $0x98] sm:$0xff]
        %v948 = vld [vmem:[#allocation2 + $0xa0] sm:$0xff]
        %v949 = vld [vmem:[#allocation2 + $0xa8] sm:$0xff]
        %v950 = vld [vmem:[#allocation2 + $0xb0] sm:$0xff]
        %v951 = vld [vmem:[#allocation2 + $0xb8] sm:$0xff]
        %v952 = vld [vmem:[#allocation2 + $0xc0] sm:$0xff]
        %v953 = vld [vmem:[#allocation2 + $0xc8] sm:$0xff]
        %v954 = vld [vmem:[#allocation2 + $0xd0] sm:$0xff]
        %v955 = vld [vmem:[#allocation2 + $0xd8] sm:$0xff]
        %v956 = vld [vmem:[#allocation2 + $0xe0] sm:$0xff]
        %v957 = vld [vmem:[#allocation2 + $0xe8] sm:$0xff]
        %v958 = vld [vmem:[#allocation2 + $0xf0] sm:$0xff]
        %v959 = vld [vmem:[#allocation2 + $0xf8] sm:$0xff]
        %v960 = vld [vmem:[#allocation2 + $0x100] sm:$0xff]
        %v961 = vld [vmem:[#allocation2 + $0x108] sm:$0xff]
        %v962 = vld [vmem:[#allocation2 + $0x110] sm:$0xff]
        %v963 = vld [vmem:[#allocation2 + $0x118] sm:$0xff]
        %v964 = vpack.c.bf16 %v932, %v928
        %v965 = vpack.c.bf16 %v933, %v929
        %v966 = vpack.c.bf16 %v934, %v930
        %v967 = vpack.c.bf16 %v935, %v931
        %v968 = vpack.c.bf16 %v940, %v936
        %v969 = vpack.c.bf16 %v941, %v937
        %v970 = vpack.c.bf16 %v942, %v938
        %v971 = vpack.c.bf16 %v943, %v939
        %v972 = vpack.c.bf16 %v948, %v944
        %v973 = vpack.c.bf16 %v949, %v945
        %v974 = vpack.c.bf16 %v950, %v946
        %v975 = vpack.c.bf16 %v951, %v947
        %v976 = vpack.c.bf16 %v956, %v952
        %v977 = vpack.c.bf16 %v957, %v953
        %v978 = vpack.c.bf16 %v958, %v954
        %v979 = vpack.c.bf16 %v959, %v955
        %v980 = vpack.c.bf16 %v960, %v960
        %v981 = vpack.c.bf16 %v961, %v961
        %v982 = vpack.c.bf16 %v962, %v962
        %v983 = vpack.c.bf16 %v963, %v963
        %v984 = vld [vmem:[%s4] sm:$0xf]
        %v985 = vld [vmem:[%s5] sm:$0xff]
        %987 = vset.pattern.permute.xlu0 0
        %988 = vperm.xlu0 %987, %v985
        %v989 = vpop.permute.xlu0 %988
        %v992 = vsel %vm661, %v984, 0
        %v995 = vsel %vm665, %v980, 0
        %v998 = vsel %vm665, %v981, 0
        %v1001 = vsel %vm665, %v982, 0
        %v1004 = vsel %vm665, %v983, 0
        %1006 = vmatprep.subr.bf16.mxu0 %v965
        %1007 = vmatpush1.bf16.msra.mxu0 %v964
        %1008 = vmatprep.subr.bf16.mxu0 %v969
        %1009 = vmatpush1.bf16.msra.mxu0 %v968
        %1010 = vmatprep.subr.bf16.mxu0 %v973
        %1011 = vmatpush1.bf16.msra.mxu0 %v972
        %1012 = vmatprep.subr.bf16.mxu0 %v977
        %1013 = vmatpush1.bf16.msra.mxu0 %v976
        %1014 = vmatprep.subr.bf16.mxu0 %v998
        %1015 = vmatpush1.bf16.msra.mxu0 %v995
        %1016 = vmatprep.subr.bf16.mxu0 0
        %1017 = vmatpush1.bf16.msra.mxu0 0
        %1018 = vmatprep.subr.bf16.mxu0 0
        %1019 = vmatpush1.bf16.msra.mxu0 0
        %1020 = vmatprep.subr.bf16.mxu0 0
        %1021 = vmatpush1.bf16.msra.mxu0 0
        %1022 = vmatprep.subr.bf16.mxu0 0
        %1023 = vmatpush1.bf16.msra.mxu0 0
        %1024 = vmatprep.subr.bf16.mxu0 0
        %1025 = vmatpush1.bf16.msra.mxu0 0
        %1026 = vmatprep.subr.bf16.mxu0 0
        %1027 = vmatpush1.bf16.msra.mxu0 0
        %1028 = vmatprep.subr.bf16.mxu0 0
        %1029 = vmatpush1.bf16.msra.mxu0 0
        %1030 = vmatprep.subr.bf16.mxu0 0
        %1031 = vmatpush1.bf16.msra.mxu0 0
        %1032 = vmatprep.subr.bf16.mxu0 0
        %1033 = vmatpush1.bf16.msra.mxu0 0
        %1034 = vmatprep.subr.bf16.mxu0 0
        %1035 = vmatpush1.bf16.msra.mxu0 0
        %1036 = vmatprep.subr.bf16.mxu0 0
        %1037 = vmatpush1.bf16.msra.mxu0 0
        %1038 = vmatprep.mubr.bf16.mxu0 0
        %1039 = vmatmul.mubr.bf16.gmra.mrb[0].mxu0 %v992
        %v1040 = vpop.f32.mrb[0].mxu0
        %v1041 = vadd.f32 %v989, %v1040
        %v1042 = vpop.f32.mrb[0].mxu0
        %v1043 = vadd.f32 %v989, %v1042
        %v1044 = vpop.f32.mrb[0].mxu0
        %v1045 = vpop.f32.mrb[0].mxu0
        %1046 = vdwg.mxu0
        %1047 = vmatprep.subr.bf16.mxu0 %v967
        %1048 = vmatpush1.bf16.msra.mxu0 %v966
        %1049 = vmatprep.subr.bf16.mxu0 %v971
        %1050 = vmatpush1.bf16.msra.mxu0 %v970
        %1051 = vmatprep.subr.bf16.mxu0 %v975
        %1052 = vmatpush1.bf16.msra.mxu0 %v974
        %1053 = vmatprep.subr.bf16.mxu0 %v979
        %1054 = vmatpush1.bf16.msra.mxu0 %v978
        %1055 = vmatprep.subr.bf16.mxu0 %v1004
        %1056 = vmatpush1.bf16.msra.mxu0 %v1001
        %1057 = vmatprep.subr.bf16.mxu0 0
        %1058 = vmatpush1.bf16.msra.mxu0 0
        %1059 = vmatprep.subr.bf16.mxu0 0
        %1060 = vmatpush1.bf16.msra.mxu0 0
        %1061 = vmatprep.subr.bf16.mxu0 0
        %1062 = vmatpush1.bf16.msra.mxu0 0
        %1063 = vmatprep.subr.bf16.mxu0 0
        %1064 = vmatpush1.bf16.msra.mxu0 0
        %1065 = vmatprep.subr.bf16.mxu0 0
        %1066 = vmatpush1.bf16.msra.mxu0 0
        %1067 = vmatprep.subr.bf16.mxu0 0
        %1068 = vmatpush1.bf16.msra.mxu0 0
        %1069 = vmatprep.subr.bf16.mxu0 0
        %1070 = vmatpush1.bf16.msra.mxu0 0
        %1071 = vmatprep.subr.bf16.mxu0 0
        %1072 = vmatpush1.bf16.msra.mxu0 0
        %1073 = vmatprep.subr.bf16.mxu0 0
        %1074 = vmatpush1.bf16.msra.mxu0 0
        %1075 = vmatprep.subr.bf16.mxu0 0
        %1076 = vmatpush1.bf16.msra.mxu0 0
        %1077 = vmatprep.subr.bf16.mxu0 0
        %1078 = vmatpush1.bf16.msra.mxu0 0
        %1079 = vmatprep.mubr.bf16.mxu0 0
        %1080 = vmatmul.mubr.bf16.gmra.mrb[0].mxu0 %v992
        %v1081 = vpop.f32.mrb[0].mxu0
        %v1082 = vadd.f32 %v989, %v1081
        %v1083 = vpop.f32.mrb[0].mxu0
        %v1084 = vadd.f32 %v989, %v1083
        %v1085 = vpop.f32.mrb[0].mxu0
        %v1086 = vpop.f32.mrb[0].mxu0
        %1087 = vdwg.mxu0
        %v1088 = vadd.f32 %v1041, %v284
        %v1089 = vadd.f32 %v1043, %v285
        %v1090 = vadd.f32 %v1082, %v286
        %v1091 = vadd.f32 %v1084, %v287
        %1092 = vst [vmem:[%s282] sm:$0xff] %v1088
        %1093 = vst [vmem:[%s282 + $0x8] sm:$0xff] %v1089
        %1094 = vst [vmem:[%s282 + $0x10] sm:$0xff] %v1090
        %1095 = vst [vmem:[%s282 + $0x18] sm:$0xff] %v1091
        %s1096 = sand.u32 %s163, 1
        %s1097 = scalar_lea.sflag [#allocation5], %s1096
        %s1098 = sand.u32 %s163, 1
        %s1099 = smul.addr %s1098, 32
        %s1100 = scalar_lea.vmem [#allocation8], %s1099
        // Predicated region
        $region53: #{tpu_custom_call.1} parent=43 // pred_check
          %p1101 = pneg %p173
        $region54: #{tpu_custom_call.1} parent=43 // pred_check_branch
          %1103 = sbr.rel (%p1101) target = $region56
        $region55: #{tpu_custom_call.1} parent=43 // pred_region
          %s1105 = ssub.s32 512, 512
          %1106 = vsyncadd %s1097, %s1105
          %s1107 = smul.addr %s24, 4
          %s1108 = smul.addr %s1107, 128
          %s1109 = scalar_lea.hbm %s6, %s1108
          %s1111 = sshll.u32 %s1100, 4
          %s1112 = int_to_ptr.vmem [resolvable:$true] %s1111
          %1114 = dma.vmem_to_hbm [thread:$0]  %s1112, 512, %s1109, %s1097
        $region56: #{tpu_custom_call.1} parent=43 // pred_fallthru
          _
      $region44: #{tpu_custom_call.1} parent=5 // pred_fallthru
        _
      %p1115 = scmp.le.s32.totalorder 2, %s19
      // Predicated region
      $region57: #{tpu_custom_call.1} parent=5 // pred_check
        %p1116 = pneg %p1115
      $region58: #{tpu_custom_call.1} parent=5 // pred_check_branch
        %1118 = sbr.rel (%p1116) target = $region60
      $region59: #{tpu_custom_call.1} parent=5 // pred_region
        %s1119 = ssub.s32 %s19, 2
        // Predicated region
        $region61: #{tpu_custom_call.1} parent=59 // pred_check
          %p1120 = pneg %p179
        $region62: #{tpu_custom_call.1} parent=59 // pred_check_branch
          %1122 = sbr.rel (%p1120) target = $region64
        $region63: #{tpu_custom_call.1} parent=59 // pred_region
          %s1123 = sand.u32 %s164, 1
          %s1124 = scalar_lea.sflag [#allocation5], %s1123
          %s1125 = sand.u32 %s164, 1
          %s1126 = smul.addr %s1125, 32
          %s1127 = scalar_lea.vmem [#allocation8], %s1126
          %1128 = dma.done %s1124, 512
        $region64: #{tpu_custom_call.1} parent=59 // pred_fallthru
          _
      $region60: #{tpu_custom_call.1} parent=5 // pred_fallthru
        _
    $region6: #{tpu_custom_call.1} parent=1 // loop_footer
      %s23 = sadd.s32 1, %s19
    $region7: #{tpu_custom_call.1} parent=1 // loop_footer_branch
      %18 = sbr.rel target = $region3
    $region8: #{tpu_custom_call.1} parent=1 // loop_exit
      _
    %1129 = vsyncpa [#allocation4], 1
    %s1130 = scalar_lea.sflag [#allocation4], 1
    %1131 = vsyncpa %s1130, 1
    %1132 = vsyncpa [#allocation7], 1
    %1133 = vsyncpa [#allocation5], 1
    %s1134 = scalar_lea.sflag [#allocation5], 1
    %1135 = vsyncpa %s1134, 1

</llo_original>
